<compile_context>
chip_gen: v7x
topology: tpu7x:2x2x1
jax: 0.10.0
libtpu: 0.0.40
codegen_flags: <defaults>
</compile_context>

<pallas_src>
import numpy as np
import jax
import jax.numpy as jnp
from jax.experimental import pallas as pl
from jax.experimental.pallas import tpu as pltpu


# ---------------------------------------------------------------------------
# host-side constant construction (numpy glue, done once)
# ---------------------------------------------------------------------------
def _bilinear_matrix(n_in: int, n_out: int) -> np.ndarray:
    """1-D interpolation matrix for bilinear upsampling, align_corners=True
    (semantics of nn.UpsamplingBilinear2d)."""
    A = np.zeros((n_out, n_in), dtype=np.float32)
    if n_in == 1:
        A[:, 0] = 1.0
        return A
    scale = (n_in - 1) / (n_out - 1)
    for i in range(n_out):
        src = i * scale
        lo = min(int(np.floor(src)), n_in - 1)
        hi = min(lo + 1, n_in - 1)
        frac = src - lo
        A[i, lo] += 1.0 - frac
        A[i, hi] += frac
    return A


def _width_upsample_matrix(aw: np.ndarray, cin: int) -> np.ndarray:
    """(W*Cin, W2*Cin) matrix: right-multiplying an (H2, W*Cin) slab applies
    the width interpolation per channel."""
    return np.kron(aw, np.eye(cin, dtype=np.float32)).T.copy()


def _conv_band_matrix(w_hwio: np.ndarray, w_out: int) -> np.ndarray:
    """Banded weight matrix (3*W*Ci, W*Co) so a 3x3 pad=1 conv of a channels-
    last row-slab becomes:  concat(rows h-1, h, h+1 on lanes) @ band."""
    kh, kw, ci, co = w_hwio.shape
    band = np.zeros((kh * w_out * ci, w_out * co), dtype=np.float32)
    for dy in range(kh):
        for dx in range(kw):
            for q in range(w_out):          # output column
                win = q + dx - 1            # input column (pad=1)
                if 0 <= win < w_out:
                    r0 = dy * w_out * ci + win * ci
                    c0 = q * co
                    band[r0:r0 + ci, c0:c0 + co] = w_hwio[dy, dx]
    return band


# ---------------------------------------------------------------------------
# Pallas kernel: one grid step == one batch element
# ---------------------------------------------------------------------------
def _up_kernel(x_ref, ah_ref, mw_ref, w1_ref, b1_ref, w2_ref, b2_ref, o_ref):
    H2 = ah_ref.shape[0]
    W2Cin = mw_ref.shape[1]
    W2Cout = w1_ref.shape[1]

    # --- separable bilinear x2 upsample (align_corners) : 2 small matmuls ---
    x = x_ref[0]                                                  # (H, W*Cin) bf16
    up_h = jnp.dot(ah_ref[...], x,
                   preferred_element_type=jnp.float32)            # (H2, W*Cin)
    up = jnp.dot(up_h.astype(jnp.bfloat16), mw_ref[...],
                 preferred_element_type=jnp.float32)              # (H2, W2*Cin)

    # --- conv1: 3x3 pad=1 as ONE matmul over a row-shifted lane stack -------
    zr1 = jnp.zeros((1, W2Cin), jnp.float32)
    up_pad = jnp.concatenate([zr1, up, zr1], axis=0)              # (H2+2, W2*Cin)
    stack1 = jnp.concatenate(
        [up_pad[0:H2], up_pad[1:H2 + 1], up_pad[2:H2 + 2]], axis=1)  # (H2, 3*W2*Cin)
    y1 = jnp.dot(stack1.astype(jnp.bfloat16), w1_ref[...],
                 preferred_element_type=jnp.float32) + b1_ref[...]   # (H2, W2*Cout)

    # --- conv2: 3x3 pad=1, same trick ---------------------------------------
    zr2 = jnp.zeros((1, W2Cout), jnp.float32)
    y1_pad = jnp.concatenate([zr2, y1, zr2], axis=0)              # (H2+2, W2*Cout)
    stack2 = jnp.concatenate(
        [y1_pad[0:H2], y1_pad[1:H2 + 1], y1_pad[2:H2 + 2]], axis=1)  # (H2, 3*W2*Cout)
    y2 = jnp.dot(stack2.astype(jnp.bfloat16), w2_ref[...],
                 preferred_element_type=jnp.float32) + b2_ref[...]   # (H2, W2*Cout)

    o_ref[0] = y2                                                 # lane-dense store


# ---------------------------------------------------------------------------
# wrapper (NCHW in / NCHW out, like the PyTorch module)
# ---------------------------------------------------------------------------
def up_forward(x_nchw, params):
    N, Cin, H, W = x_nchw.shape
    H2, W2 = 2 * H, 2 * W
    Cout = params["cout"]

    # NCHW -> (N, H, W*Cin), bf16 operands for the MXU
    x = jnp.transpose(x_nchw, (0, 2, 3, 1)).reshape(N, H, W * Cin)
    x = x.astype(jnp.bfloat16)

    out_flat = pl.pallas_call(
        _up_kernel,
        out_shape=jax.ShapeDtypeStruct((N, H2, W2 * Cout), jnp.float32),
        grid_spec=pltpu.PrefetchScalarGridSpec(
            num_scalar_prefetch=0,
            grid=(N,),
            in_specs=[
                pl.BlockSpec((1, H, W * Cin), lambda b: (b, 0, 0)),
                pl.BlockSpec((H2, H), lambda b: (0, 0)),
                pl.BlockSpec((W * Cin, W2 * Cin), lambda b: (0, 0)),
                pl.BlockSpec((3 * W2 * Cin, W2 * Cout), lambda b: (0, 0)),
                pl.BlockSpec((1, W2 * Cout), lambda b: (0, 0)),
                pl.BlockSpec((3 * W2 * Cout, W2 * Cout), lambda b: (0, 0)),
                pl.BlockSpec((1, W2 * Cout), lambda b: (0, 0)),
            ],
            out_specs=pl.BlockSpec((1, H2, W2 * Cout), lambda b: (b, 0, 0)),
        ),
        compiler_params=pltpu.CompilerParams(
            dimension_semantics=("parallel",),      # batch-parallel (v7x 2 TCs)
            vmem_limit_bytes=32 * 1024 * 1024),
    )(x, params["ah"], params["mw"], params["w1b"], params["b1t"],
      params["w2b"], params["b2t"])

    # (N, H2, W2*Cout) -> NCHW
    out = out_flat.reshape(N, H2, W2, Cout)
    return jnp.transpose(out, (0, 3, 1, 2))


def build_params(w1_oihw, b1, w2_oihw, b2, H, W):
    Cout, Cin = w1_oihw.shape[0], w1_oihw.shape[1]
    H2, W2 = 2 * H, 2 * W
    ah = _bilinear_matrix(H, H2)                       # (H2, H)
    aw = _bilinear_matrix(W, W2)                       # (W2, W)
    mw = _width_upsample_matrix(aw, Cin)               # (W*Cin, W2*Cin)
    w1_hwio = np.transpose(np.asarray(w1_oihw), (2, 3, 1, 0))
    w2_hwio = np.transpose(np.asarray(w2_oihw), (2, 3, 1, 0))
    w1b = _conv_band_matrix(w1_hwio, W2)               # (3*W2*Cin, W2*Cout)
    w2b = _conv_band_matrix(w2_hwio, W2)               # (3*W2*Cout, W2*Cout)
    return {
        "cout": Cout,
        "ah": jnp.asarray(ah, dtype=jnp.bfloat16),
        "mw": jnp.asarray(mw, dtype=jnp.bfloat16),
        "w1b": jnp.asarray(w1b, dtype=jnp.bfloat16),
        "w2b": jnp.asarray(w2b, dtype=jnp.bfloat16),
        "b1t": jnp.asarray(np.tile(np.asarray(b1), W2).reshape(1, W2 * Cout),
                           dtype=jnp.float32),
        "b2t": jnp.asarray(np.tile(np.asarray(b2), W2).reshape(1, W2 * Cout),
                           dtype=jnp.float32),
        "ah_f32": jnp.asarray(ah),
        "aw_f32": jnp.asarray(aw),
    }


# ---------------------------------------------------------------------------
# pure-JAX reference (correctness check, no torch)
# ---------------------------------------------------------------------------
def reference_forward(x_nchw, w1_oihw, b1, w2_oihw, b2, ah, aw):
    up = jnp.einsum("ih,jw,nchw->ncij", ah, aw, x_nchw)
    dn = ("NCHW", "OIHW", "NCHW")
    y1 = jax.lax.conv_general_dilated(
        up, w1_oihw, (1, 1), [(1, 1), (1, 1)], dimension_numbers=dn)
    y1 = y1 + b1[None, :, None, None]
    y2 = jax.lax.conv_general_dilated(
        y1, w2_oihw, (1, 1), [(1, 1), (1, 1)], dimension_numbers=dn)
    return y2 + b2[None, :, None, None]


# ---------------------------------------------------------------------------
if __name__ == "__main__":
    key = jax.random.PRNGKey(0)
    N, Cin, H, W = 2, 4, 16, 16          # Up(intake=4, out=8)
    Cout = 8
    H2, W2 = 2 * H, 2 * W

    k_x, k_w1, k_b1, k_w2, k_b2 = jax.random.split(key, 5)
    x = jax.random.normal(k_x, (N, Cin, H, W), jnp.float32)

    # deterministic PyTorch-style init: U(-1/sqrt(fan_in), 1/sqrt(fan_in))
    fan1 = Cin * 9
    fan2 = Cout * 9
    w1_oihw = jax.random.uniform(k_w1, (Cout, Cin, 3, 3), jnp.float32,
                                 -1.0 / np.sqrt(fan1), 1.0 / np.sqrt(fan1))
    b1 = jax.random.uniform(k_b1, (Cout,), jnp.float32,
                            -1.0 / np.sqrt(fan1), 1.0 / np.sqrt(fan1))
    w2_oihw = jax.random.uniform(k_w2, (Cout, Cout, 3, 3), jnp.float32,
                                 -1.0 / np.sqrt(fan2), 1.0 / np.sqrt(fan2))
    b2 = jax.random.uniform(k_b2, (Cout,), jnp.float32,
                            -1.0 / np.sqrt(fan2), 1.0 / np.sqrt(fan2))

    params = build_params(w1_oihw, b1, w2_oihw, b2, H, W)

    out = up_forward(x, params)
    out = jax.block_until_ready(out)
    assert out.shape == (N, Cout, H2, W2), out.shape

    ref = reference_forward(x, w1_oihw, b1, w2_oihw, b2,
                            params["ah_f32"], params["aw_f32"])
    ref = jax.block_until_ready(ref)

    # bf16 matmul operands (f32 accumulation) vs f32 reference
    if not np.allclose(np.asarray(out), np.asarray(ref), atol=3e-2, rtol=3e-2):
        err = float(jnp.max(jnp.abs(out - ref)))
        raise AssertionError(f"Pallas kernel mismatch vs reference, max err={err}")

    print("KERNEL_OK")
</pallas_src>

<mosaic_0001>
module attributes {stable_mosaic.version = 11 : i64} {
  func.func @_up_kernel(%arg0: i32, %arg1: memref<1x16x64xbf16, #tpu.memory_space<vmem>>, %arg2: memref<32x16xbf16, #tpu.memory_space<vmem>>, %arg3: memref<64x128xbf16, #tpu.memory_space<vmem>>, %arg4: memref<384x256xbf16, #tpu.memory_space<vmem>>, %arg5: memref<1x256xf32, #tpu.memory_space<vmem>>, %arg6: memref<768x256xbf16, #tpu.memory_space<vmem>>, %arg7: memref<1x256xf32, #tpu.memory_space<vmem>>, %arg8: memref<1x32x256xf32, #tpu.memory_space<vmem>>) attributes {dimension_semantics = [#tpu.dimension_semantics<parallel>], iteration_bounds = array<i64: 2>, scalar_prefetch = 0 : i64, scratch_operands = 0 : i64, tpu.core_type = #tpu.core_type<tc>, window_params = [{transform_indices = @transform_0, window_bounds = array<i64: 1, 16, 64>}, {pipeline_mode = #tpu.pipeline_mode<synchronous>, transform_indices = @transform_1, window_bounds = array<i64: 32, 16>}, {pipeline_mode = #tpu.pipeline_mode<synchronous>, transform_indices = @transform_2, window_bounds = array<i64: 64, 128>}, {pipeline_mode = #tpu.pipeline_mode<synchronous>, transform_indices = @transform_3, window_bounds = array<i64: 384, 256>}, {pipeline_mode = #tpu.pipeline_mode<synchronous>, transform_indices = @transform_4, window_bounds = array<i64: 1, 256>}, {pipeline_mode = #tpu.pipeline_mode<synchronous>, transform_indices = @transform_5, window_bounds = array<i64: 768, 256>}, {pipeline_mode = #tpu.pipeline_mode<synchronous>, transform_indices = @transform_6, window_bounds = array<i64: 1, 256>}, {transform_indices = @transform_7, window_bounds = array<i64: 1, 32, 256>}]} {
    %c0 = arith.constant 0 : index
    %c0_0 = arith.constant 0 : index
    %c0_1 = arith.constant 0 : index
    %0 = vector.load %arg1[%c0, %c0_0, %c0_1] : memref<1x16x64xbf16, #tpu.memory_space<vmem>>, vector<1x16x64xbf16>
    %1 = vector.shape_cast %0 : vector<1x16x64xbf16> to vector<16x64xbf16>
    %c0_2 = arith.constant 0 : index
    %c0_3 = arith.constant 0 : index
    %2 = vector.load %arg2[%c0_2, %c0_3] : memref<32x16xbf16, #tpu.memory_space<vmem>>, vector<32x16xbf16>
    %cst = arith.constant dense<0.000000e+00> : vector<32x64xf32>
    %3 = tpu.matmul %2, %1, %cst {dimension_numbers = #tpu.dot_dimension_numbers<[1], [0], [0], [1], [0, 0, 1, 1], [], []>} : vector<32x16xbf16>, vector<16x64xbf16>, vector<32x64xf32> -> vector<32x64xf32>
    %4 = arith.truncf %3 : vector<32x64xf32> to vector<32x64xbf16>
    %c0_4 = arith.constant 0 : index
    %c0_5 = arith.constant 0 : index
    %5 = vector.load %arg3[%c0_4, %c0_5] : memref<64x128xbf16, #tpu.memory_space<vmem>>, vector<64x128xbf16>
    %cst_6 = arith.constant dense<0.000000e+00> : vector<32x128xf32>
    %6 = tpu.matmul %4, %5, %cst_6 {dimension_numbers = #tpu.dot_dimension_numbers<[1], [0], [0], [1], [0, 0, 1, 1], [], []>} : vector<32x64xbf16>, vector<64x128xbf16>, vector<32x128xf32> -> vector<32x128xf32>
    %cst_7 = arith.constant 0.000000e+00 : f32
    %7 = vector.broadcast %cst_7 : f32 to vector<1x128xf32>
    %8 = tpu.concatenate %7, %6, %7 in 0 : vector<1x128xf32>, vector<32x128xf32>, vector<1x128xf32> -> vector<34x128xf32>
    %9 = vector.extract_strided_slice %8 {offsets = [0, 0], sizes = [32, 128], strides = [1, 1]} : vector<34x128xf32> to vector<32x128xf32>
    %10 = vector.extract_strided_slice %8 {offsets = [1, 0], sizes = [32, 128], strides = [1, 1]} : vector<34x128xf32> to vector<32x128xf32>
    %11 = vector.extract_strided_slice %8 {offsets = [2, 0], sizes = [32, 128], strides = [1, 1]} : vector<34x128xf32> to vector<32x128xf32>
    %12 = tpu.concatenate %9, %10, %11 in 1 : vector<32x128xf32>, vector<32x128xf32>, vector<32x128xf32> -> vector<32x384xf32>
    %13 = arith.truncf %12 : vector<32x384xf32> to vector<32x384xbf16>
    %c0_8 = arith.constant 0 : index
    %c0_9 = arith.constant 0 : index
    %14 = vector.load %arg4[%c0_8, %c0_9] : memref<384x256xbf16, #tpu.memory_space<vmem>>, vector<384x256xbf16>
    %cst_10 = arith.constant dense<0.000000e+00> : vector<32x256xf32>
    %15 = tpu.matmul %13, %14, %cst_10 {dimension_numbers = #tpu.dot_dimension_numbers<[1], [0], [0], [1], [0, 0, 1, 1], [], []>} : vector<32x384xbf16>, vector<384x256xbf16>, vector<32x256xf32> -> vector<32x256xf32>
    %c0_11 = arith.constant 0 : index
    %c0_12 = arith.constant 0 : index
    %16 = vector.load %arg5[%c0_11, %c0_12] : memref<1x256xf32, #tpu.memory_space<vmem>>, vector<1x256xf32>
    %17 = vector.broadcast %16 : vector<1x256xf32> to vector<32x256xf32>
    %18 = arith.addf %15, %17 : vector<32x256xf32>
    %cst_13 = arith.constant 0.000000e+00 : f32
    %19 = vector.broadcast %cst_13 : f32 to vector<1x256xf32>
    %20 = tpu.concatenate %19, %18, %19 in 0 : vector<1x256xf32>, vector<32x256xf32>, vector<1x256xf32> -> vector<34x256xf32>
    %21 = vector.extract_strided_slice %20 {offsets = [0, 0], sizes = [32, 256], strides = [1, 1]} : vector<34x256xf32> to vector<32x256xf32>
    %22 = vector.extract_strided_slice %20 {offsets = [1, 0], sizes = [32, 256], strides = [1, 1]} : vector<34x256xf32> to vector<32x256xf32>
    %23 = vector.extract_strided_slice %20 {offsets = [2, 0], sizes = [32, 256], strides = [1, 1]} : vector<34x256xf32> to vector<32x256xf32>
    %24 = tpu.concatenate %21, %22, %23 in 1 : vector<32x256xf32>, vector<32x256xf32>, vector<32x256xf32> -> vector<32x768xf32>
    %25 = arith.truncf %24 : vector<32x768xf32> to vector<32x768xbf16>
    %c0_14 = arith.constant 0 : index
    %c0_15 = arith.constant 0 : index
    %26 = vector.load %arg6[%c0_14, %c0_15] : memref<768x256xbf16, #tpu.memory_space<vmem>>, vector<768x256xbf16>
    %cst_16 = arith.constant dense<0.000000e+00> : vector<32x256xf32>
    %27 = tpu.matmul %25, %26, %cst_16 {dimension_numbers = #tpu.dot_dimension_numbers<[1], [0], [0], [1], [0, 0, 1, 1], [], []>} : vector<32x768xbf16>, vector<768x256xbf16>, vector<32x256xf32> -> vector<32x256xf32>
    %c0_17 = arith.constant 0 : index
    %c0_18 = arith.constant 0 : index
    %28 = vector.load %arg7[%c0_17, %c0_18] : memref<1x256xf32, #tpu.memory_space<vmem>>, vector<1x256xf32>
    %29 = vector.broadcast %28 : vector<1x256xf32> to vector<32x256xf32>
    %30 = arith.addf %27, %29 : vector<32x256xf32>
    %c0_19 = arith.constant 0 : index
    %c0_20 = arith.constant 0 : index
    %c0_21 = arith.constant 0 : index
    %31 = vector.load %arg8[%c0_19, %c0_20, %c0_21] : memref<1x32x256xf32, #tpu.memory_space<vmem>>, vector<1x32x256xf32>
    %32 = vector.shape_cast %31 : vector<1x32x256xf32> to vector<32x256xf32>
    %33 = vector.shape_cast %30 : vector<32x256xf32> to vector<1x32x256xf32>
    tpu.vector_store %arg8[%c0_19, %c0_20, %c0_21], %33 {strides = array<i32>} : memref<1x32x256xf32, #tpu.memory_space<vmem>>, vector<1x32x256xf32>,
    return
  }
  func.func @transform_0(%arg0: i32) -> (i32, i32, i32) {
    %c0_i32 = arith.constant 0 : i32
    %c0_i32_0 = arith.constant 0 : i32
    %c0_i32_1 = arith.constant 0 : i32
    return %arg0, %c0_i32, %c0_i32_0 : i32, i32, i32
  }
  func.func @transform_1(%arg0: i32) -> (i32, i32) {
    %c0_i32 = arith.constant 0 : i32
    %c0_i32_0 = arith.constant 0 : i32
    %c0_i32_1 = arith.constant 0 : i32
    return %c0_i32, %c0_i32_0 : i32, i32
  }
  func.func @transform_2(%arg0: i32) -> (i32, i32) {
    %c0_i32 = arith.constant 0 : i32
    %c0_i32_0 = arith.constant 0 : i32
    %c0_i32_1 = arith.constant 0 : i32
    return %c0_i32, %c0_i32_0 : i32, i32
  }
  func.func @transform_3(%arg0: i32) -> (i32, i32) {
    %c0_i32 = arith.constant 0 : i32
    %c0_i32_0 = arith.constant 0 : i32
    %c0_i32_1 = arith.constant 0 : i32
    return %c0_i32, %c0_i32_0 : i32, i32
  }
  func.func @transform_4(%arg0: i32) -> (i32, i32) {
    %c0_i32 = arith.constant 0 : i32
    %c0_i32_0 = arith.constant 0 : i32
    %c0_i32_1 = arith.constant 0 : i32
    return %c0_i32, %c0_i32_0 : i32, i32
  }
  func.func @transform_5(%arg0: i32) -> (i32, i32) {
    %c0_i32 = arith.constant 0 : i32
    %c0_i32_0 = arith.constant 0 : i32
    %c0_i32_1 = arith.constant 0 : i32
    return %c0_i32, %c0_i32_0 : i32, i32
  }
  func.func @transform_6(%arg0: i32) -> (i32, i32) {
    %c0_i32 = arith.constant 0 : i32
    %c0_i32_0 = arith.constant 0 : i32
    %c0_i32_1 = arith.constant 0 : i32
    return %c0_i32, %c0_i32_0 : i32, i32
  }
  func.func @transform_7(%arg0: i32) -> (i32, i32, i32) {
    %c0_i32 = arith.constant 0 : i32
    %c0_i32_0 = arith.constant 0 : i32
    %c0_i32_1 = arith.constant 0 : i32
    return %arg0, %c0_i32, %c0_i32_0 : i32, i32, i32
  }
}

</mosaic_0001>

<llo_original>
// kernel: tpu_custom_call.1
$region0: #{tpu_custom_call.1}
  #allocation0 [shape = 'u32[]', space=smem, size = 0x4, offset = 0x4, fixed_abs, tag = 'smem constant byte address 0x4 - core index']
  #allocation1 [shape = 'u32[144,128]{1,0:T(1,128)}', space=vmem, size = 0x12000, scoped, tag = 'internal scratch']
  %s0 = inlined_call_operand.vmem [shape: bf16[2,16,64], index: 0, kind: input, shape index: {}]
  %s1 = inlined_call_operand.vmem [shape: bf16[32,16], index: 1, kind: input, shape index: {}]
  %s2 = inlined_call_operand.hbm [shape: bf16[64,128], index: 2, kind: input, shape index: {}]
  %s3 = inlined_call_operand.hbm [shape: bf16[384,256], index: 3, kind: input, shape index: {}]
  %s4 = inlined_call_operand.vmem [shape: f32[1,256], index: 4, kind: input, shape index: {}]
  %s5 = inlined_call_operand.hbm [shape: bf16[768,256], index: 5, kind: input, shape index: {}]
  %s6 = inlined_call_operand.vmem [shape: f32[1,256], index: 6, kind: input, shape index: {}]
  %s7 = inlined_call_operand.hbm [shape: f32[2,32,256], index: 7, kind: output, shape index: {}]
  %s8 = sld [smem:[#allocation0]]
  $region73: #{tpu_custom_call.1} parent=0
    _
  %s10 = ssub.s32 1, %s8
  %s11 = scalar_select 0, %s10, %s8
  $region1: #{tpu_custom_call.1} parent=0
    #allocation2 [shape = 'u8[16384]{0}', space=vmem, size = 0x4000, scoped, tag = 'input window, operand 2, single buffered']
    #allocation3 [shape = 's32[2]{0}', space=sflag, size = 0x8, scoped, tag = 'scoped memory for tpu_custom_call.1']
    #allocation4 [shape = 's32[2]{0}', space=sflag, size = 0x8, scoped, tag = 'scoped memory for tpu_custom_call.1']
    #allocation5 [shape = 'u8[196608]{0}', space=vmem, size = 0x30000, scoped, tag = 'input window, operand 3, single buffered']
    #allocation6 [shape = 's32[1]{0}', space=sflag, size = 0x4, scoped, tag = 'scoped memory for tpu_custom_call.1']
    #allocation7 [shape = 'u8[393216]{0}', space=vmem, size = 0x60000, scoped, tag = 'input window, operand 5, single buffered']
    #allocation8 [shape = 'u8[65536]{0}', space=vmem, size = 0x10000, scoped, tag = 'output window, operand 0']
    %12 = vsyncpa [#allocation3], 0
    %13 = vsyncpa [#allocation6], 0
    %14 = vsyncpa [#allocation4], 0
    %s15 = scalar_lea.sflag [#allocation4], 1
    %16 = vsyncpa %s15, 0
    loop: start=0, step=1, limit=4
    $region2: #{tpu_custom_call.1} parent=1 // loop_pre_header
      _
    $region3: #{tpu_custom_call.1} parent=1 // loop_header
      %s18 = sphi 0, %s22
      %p19 = scmp.ge.s32.totalorder %s18, 4
      %s28 = sphi 0, %s30
      %s31 = sphi 0, %s28
      %s32 = sphi 0, %s31
      %s48 = sphi 0, %s32
      %s52 = sphi 0, %s52
      %s54 = sphi 0, %s52
      %s55 = sphi 0, %s54
      %s69 = sphi 0, %s55
      %s73 = sphi 0, %s73
      %s75 = sphi 0, %s73
      %s76 = sphi 0, %s75
      %s90 = sphi 0, %s76
      %s94 = sphi 0, %s94
      %s96 = sphi 0, %s94
      %s97 = sphi 0, %s96
      %s111 = sphi 0, %s97
      %s115 = sphi 0, %s115
      %s117 = sphi 0, %s115
      %s118 = sphi 0, %s117
      %s132 = sphi 0, %s118
      %s136 = sphi 0, %s136
      %s138 = sphi 0, %s136
      %s139 = sphi 0, %s138
      %s153 = sphi 0, %s139
      %s157 = sphi 0, %s157
      %s159 = sphi 0, %s157
      %s160 = sphi 0, %s159
      %s174 = sphi 0, %s160
      %s180 = sphi 0, %s182
      %s183 = sphi 0, %s180
      %s184 = sphi 0, %s183
      %s200 = sphi 0, %s184
    $region4: #{tpu_custom_call.1} parent=1 // loop_header_branch
      %21 = sbr.rel (%p19) target = $region8
    $region5: #{tpu_custom_call.1} parent=1 // loop_body
      %s23 = ssub.s32 %s18, 1
      %s24 = ssub.s32 %s18, 2
      %s25 = sadd.s32 %s18, 1
      %s26 = ssub.s32 %s18, %s25
      %p27 = scmp.eq.s32.totalorder %s26, 0
      %s29 = sadd.s32 %s28, 1
      %s30 = scalar_select %p27, %s28, %s29
      %p33 = pneg %p27
      %p34 = scmp.eq.s32.totalorder %s18, 1
      %p35 = por %p33, %p34
      %p36 = scmp.ne.s32.totalorder %s28, %s31
      %p37 = scmp.eq.s32.totalorder %s18, 0
      %p38 = por %p36, %p37
      %p39 = scmp.ne.s32.totalorder %s28, %s31
      %p40 = scmp.eq.s32.totalorder %s23, 1
      %p41 = por %p39, %p40
      %p42 = scmp.ne.s32.totalorder %s31, %s32
      %p43 = scmp.eq.s32.totalorder %s23, 0
      %p44 = por %p42, %p43
      %p45 = scmp.ne.s32.totalorder %s31, %s32
      %p46 = scmp.eq.s32.totalorder %s24, 1
      %p47 = por %p45, %p46
      %p49 = scmp.ne.s32.totalorder %s32, %s48
      %p50 = scmp.eq.s32.totalorder %s24, 0
      %p51 = por %p49, %p50
      %s53 = sadd.s32 %s52, 1
      %p56 = scmp.eq.s32.totalorder %s18, 1
      %p57 = scmp.ne.s32.totalorder %s52, %s54
      %p58 = scmp.eq.s32.totalorder %s18, 0
      %p59 = por %p57, %p58
      %p60 = scmp.ne.s32.totalorder %s52, %s54
      %p61 = scmp.eq.s32.totalorder %s23, 1
      %p62 = por %p60, %p61
      %p63 = scmp.ne.s32.totalorder %s54, %s55
      %p64 = scmp.eq.s32.totalorder %s23, 0
      %p65 = por %p63, %p64
      %p66 = scmp.ne.s32.totalorder %s54, %s55
      %p67 = scmp.eq.s32.totalorder %s24, 1
      %p68 = por %p66, %p67
      %p70 = scmp.ne.s32.totalorder %s55, %s69
      %p71 = scmp.eq.s32.totalorder %s24, 0
      %p72 = por %p70, %p71
      %s74 = sadd.s32 %s73, 1
      %p77 = scmp.eq.s32.totalorder %s18, 1
      %p78 = scmp.ne.s32.totalorder %s73, %s75
      %p79 = scmp.eq.s32.totalorder %s18, 0
      %p80 = por %p78, %p79
      %p81 = scmp.ne.s32.totalorder %s73, %s75
      %p82 = scmp.eq.s32.totalorder %s23, 1
      %p83 = por %p81, %p82
      %p84 = scmp.ne.s32.totalorder %s75, %s76
      %p85 = scmp.eq.s32.totalorder %s23, 0
      %p86 = por %p84, %p85
      %p87 = scmp.ne.s32.totalorder %s75, %s76
      %p88 = scmp.eq.s32.totalorder %s24, 1
      %p89 = por %p87, %p88
      %p91 = scmp.ne.s32.totalorder %s76, %s90
      %p92 = scmp.eq.s32.totalorder %s24, 0
      %p93 = por %p91, %p92
      %s95 = sadd.s32 %s94, 1
      %p98 = scmp.eq.s32.totalorder %s18, 1
      %p99 = scmp.ne.s32.totalorder %s94, %s96
      %p100 = scmp.eq.s32.totalorder %s18, 0
      %p101 = por %p99, %p100
      %p102 = scmp.ne.s32.totalorder %s94, %s96
      %p103 = scmp.eq.s32.totalorder %s23, 1
      %p104 = por %p102, %p103
      %p105 = scmp.ne.s32.totalorder %s96, %s97
      %p106 = scmp.eq.s32.totalorder %s23, 0
      %p107 = por %p105, %p106
      %p108 = scmp.ne.s32.totalorder %s96, %s97
      %p109 = scmp.eq.s32.totalorder %s24, 1
      %p110 = por %p108, %p109
      %p112 = scmp.ne.s32.totalorder %s97, %s111
      %p113 = scmp.eq.s32.totalorder %s24, 0
      %p114 = por %p112, %p113
      %s116 = sadd.s32 %s115, 1
      %p119 = scmp.eq.s32.totalorder %s18, 1
      %p120 = scmp.ne.s32.totalorder %s115, %s117
      %p121 = scmp.eq.s32.totalorder %s18, 0
      %p122 = por %p120, %p121
      %p123 = scmp.ne.s32.totalorder %s115, %s117
      %p124 = scmp.eq.s32.totalorder %s23, 1
      %p125 = por %p123, %p124
      %p126 = scmp.ne.s32.totalorder %s117, %s118
      %p127 = scmp.eq.s32.totalorder %s23, 0
      %p128 = por %p126, %p127
      %p129 = scmp.ne.s32.totalorder %s117, %s118
      %p130 = scmp.eq.s32.totalorder %s24, 1
      %p131 = por %p129, %p130
      %p133 = scmp.ne.s32.totalorder %s118, %s132
      %p134 = scmp.eq.s32.totalorder %s24, 0
      %p135 = por %p133, %p134
      %s137 = sadd.s32 %s136, 1
      %p140 = scmp.eq.s32.totalorder %s18, 1
      %p141 = scmp.ne.s32.totalorder %s136, %s138
      %p142 = scmp.eq.s32.totalorder %s18, 0
      %p143 = por %p141, %p142
      %p144 = scmp.ne.s32.totalorder %s136, %s138
      %p145 = scmp.eq.s32.totalorder %s23, 1
      %p146 = por %p144, %p145
      %p147 = scmp.ne.s32.totalorder %s138, %s139
      %p148 = scmp.eq.s32.totalorder %s23, 0
      %p149 = por %p147, %p148
      %p150 = scmp.ne.s32.totalorder %s138, %s139
      %p151 = scmp.eq.s32.totalorder %s24, 1
      %p152 = por %p150, %p151
      %p154 = scmp.ne.s32.totalorder %s139, %s153
      %p155 = scmp.eq.s32.totalorder %s24, 0
      %p156 = por %p154, %p155
      %s158 = sadd.s32 %s157, 1
      %p161 = scmp.eq.s32.totalorder %s18, 1
      %p162 = scmp.ne.s32.totalorder %s157, %s159
      %p163 = scmp.eq.s32.totalorder %s18, 0
      %p164 = por %p162, %p163
      %p165 = scmp.ne.s32.totalorder %s157, %s159
      %p166 = scmp.eq.s32.totalorder %s23, 1
      %p167 = por %p165, %p166
      %p168 = scmp.ne.s32.totalorder %s159, %s160
      %p169 = scmp.eq.s32.totalorder %s23, 0
      %p170 = por %p168, %p169
      %p171 = scmp.ne.s32.totalorder %s159, %s160
      %p172 = scmp.eq.s32.totalorder %s24, 1
      %p173 = por %p171, %p172
      %p175 = scmp.ne.s32.totalorder %s160, %s174
      %p176 = scmp.eq.s32.totalorder %s24, 0
      %p177 = por %p175, %p176
      %s178 = ssub.s32 %s18, %s25
      %p179 = scmp.eq.s32.totalorder %s178, 0
      %s181 = sadd.s32 %s180, 1
      %s182 = scalar_select %p179, %s180, %s181
      %p185 = pneg %p179
      %p186 = scmp.eq.s32.totalorder %s18, 1
      %p187 = por %p185, %p186
      %p188 = scmp.ne.s32.totalorder %s180, %s183
      %p189 = scmp.eq.s32.totalorder %s18, 0
      %p190 = por %p188, %p189
      %p191 = scmp.ne.s32.totalorder %s180, %s183
      %p192 = scmp.eq.s32.totalorder %s23, 1
      %p193 = por %p191, %p192
      %p194 = scmp.ne.s32.totalorder %s183, %s184
      %p195 = scmp.eq.s32.totalorder %s23, 0
      %p196 = por %p194, %p195
      %p197 = scmp.ne.s32.totalorder %s183, %s184
      %p198 = scmp.eq.s32.totalorder %s24, 1
      %p199 = por %p197, %p198
      %p201 = scmp.ne.s32.totalorder %s184, %s200
      %p202 = scmp.eq.s32.totalorder %s24, 0
      %p203 = por %p201, %p202
      %p204 = scmp.le.s32.totalorder 1, %s18
      %p205 = scmp.lt.s32.totalorder %s18, 3
      %p206 = pnand %p204, %p205
      %p207 = pneg %p206
      // Predicated region
      $region9: #{tpu_custom_call.1} parent=5 // pred_check
        _
      $region10: #{tpu_custom_call.1} parent=5 // pred_check_branch
        %209 = sbr.rel (%p206) target = $region12
      $region11: #{tpu_custom_call.1} parent=5 // pred_region
        %s210 = ssub.s32 %s18, 1
        // Predicated region
        $region13: #{tpu_custom_call.1} parent=11 // pred_check
          %p211 = pneg %p65
        $region14: #{tpu_custom_call.1} parent=11 // pred_check_branch
          %213 = sbr.rel (%p211) target = $region16
        $region15: #{tpu_custom_call.1} parent=11 // pred_region
          _
        $region16: #{tpu_custom_call.1} parent=11 // pred_fallthru
          _
        // Predicated region
        $region17: #{tpu_custom_call.1} parent=11 // pred_check
          %p214 = pneg %p86
        $region18: #{tpu_custom_call.1} parent=11 // pred_check_branch
          %216 = sbr.rel (%p214) target = $region20
        $region19: #{tpu_custom_call.1} parent=11 // pred_region
          %s218 = ssub.s32 512, 512
          %219 = vsyncadd [#allocation3], %s218
          %s220 = sshll.u32 [#allocation2], 4
          %s221 = int_to_ptr.vmem [resolvable:$true] %s220
          %226 = dma.hbm_to_vmem [thread:$0]  %s2, 512, %s221, [#allocation3], 64, 64, 4
        $region20: #{tpu_custom_call.1} parent=11 // pred_fallthru
          _
        // Predicated region
        $region21: #{tpu_custom_call.1} parent=11 // pred_check
          %p227 = pneg %p107
        $region22: #{tpu_custom_call.1} parent=11 // pred_check_branch
          %229 = sbr.rel (%p227) target = $region24
        $region23: #{tpu_custom_call.1} parent=11 // pred_region
          %s231 = ssub.s32 6144, 6144
          %232 = vsyncadd [#allocation6], %s231
          %s233 = sshll.u32 [#allocation5], 4
          %s234 = int_to_ptr.vmem [resolvable:$true] %s233
          %239 = dma.hbm_to_vmem [thread:$0]  %s3, 6144, %s234, [#allocation6], 128, 128, 8
        $region24: #{tpu_custom_call.1} parent=11 // pred_fallthru
          _
        // Predicated region
        $region25: #{tpu_custom_call.1} parent=11 // pred_check
          %p240 = pneg %p128
        $region26: #{tpu_custom_call.1} parent=11 // pred_check_branch
          %242 = sbr.rel (%p240) target = $region28
        $region27: #{tpu_custom_call.1} parent=11 // pred_region
          _
        $region28: #{tpu_custom_call.1} parent=11 // pred_fallthru
          _
        // Predicated region
        $region29: #{tpu_custom_call.1} parent=11 // pred_check
          %p243 = pneg %p149
        $region30: #{tpu_custom_call.1} parent=11 // pred_check_branch
          %245 = sbr.rel (%p243) target = $region32
        $region31: #{tpu_custom_call.1} parent=11 // pred_region
          %s247 = ssub.s32 12288, 12288
          %248 = vsyncadd [#allocation6], %s247
          %s249 = sshll.u32 [#allocation7], 4
          %s250 = int_to_ptr.vmem [resolvable:$true] %s249
          %255 = dma.hbm_to_vmem [thread:$0]  %s5, 12288, %s250, [#allocation6], 128, 128, 8
        $region32: #{tpu_custom_call.1} parent=11 // pred_fallthru
          _
        // Predicated region
        $region33: #{tpu_custom_call.1} parent=11 // pred_check
          %p256 = pneg %p170
        $region34: #{tpu_custom_call.1} parent=11 // pred_check_branch
          %258 = sbr.rel (%p256) target = $region36
        $region35: #{tpu_custom_call.1} parent=11 // pred_region
          _
        $region36: #{tpu_custom_call.1} parent=11 // pred_fallthru
          _
      $region12: #{tpu_custom_call.1} parent=5 // pred_fallthru
        _
      %p259 = scmp.lt.s32.totalorder %s18, 2
      // Predicated region
      $region37: #{tpu_custom_call.1} parent=5 // pred_check
        %p260 = pneg %p259
      $region38: #{tpu_custom_call.1} parent=5 // pred_check_branch
        %262 = sbr.rel (%p260) target = $region40
      $region39: #{tpu_custom_call.1} parent=5 // pred_region
        // Predicated region
        $region41: #{tpu_custom_call.1} parent=39 // pred_check
          %p263 = pneg %p38
        $region42: #{tpu_custom_call.1} parent=39 // pred_check_branch
          %265 = sbr.rel (%p263) target = $region44
        $region43: #{tpu_custom_call.1} parent=39 // pred_region
          %p266 = scmp.lt.s32.totalorder %s18, 1
          %s267 = scalar_select %p266, %s18, 1
          %s268 = smul.addr %s267, 2
          %s269 = smul.addr %s268, 4
          %s270 = scalar_lea.vmem %s0, %s269
        $region44: #{tpu_custom_call.1} parent=39 // pred_fallthru
          _
      $region40: #{tpu_custom_call.1} parent=5 // pred_fallthru
        _
      %p271 = scmp.le.s32.totalorder 1, %s18
      %p272 = scmp.lt.s32.totalorder %s18, 3
      %p273 = pnand %p271, %p272
      %p274 = pneg %p273
      // Predicated region
      $region45: #{tpu_custom_call.1} parent=5 // pred_check
        _
      $region46: #{tpu_custom_call.1} parent=5 // pred_check_branch
        %276 = sbr.rel (%p273) target = $region48
      $region47: #{tpu_custom_call.1} parent=5 // pred_region
        %s277 = ssub.s32 %s18, 1
        // Predicated region
        $region49: #{tpu_custom_call.1} parent=47 // pred_check
          %p278 = pneg %p86
        $region50: #{tpu_custom_call.1} parent=47 // pred_check_branch
          %280 = sbr.rel (%p278) target = $region52
        $region51: #{tpu_custom_call.1} parent=47 // pred_region
          %281 = dma.done [#allocation3], 512
        $region52: #{tpu_custom_call.1} parent=47 // pred_fallthru
          _
        // Predicated region
        $region53: #{tpu_custom_call.1} parent=47 // pred_check
          %p282 = pneg %p107
        $region54: #{tpu_custom_call.1} parent=47 // pred_check_branch
          %284 = sbr.rel (%p282) target = $region56
        $region55: #{tpu_custom_call.1} parent=47 // pred_region
          %285 = dma.done [#allocation6], 6144
        $region56: #{tpu_custom_call.1} parent=47 // pred_fallthru
          _
        // Predicated region
        $region57: #{tpu_custom_call.1} parent=47 // pred_check
          %p286 = pneg %p149
        $region58: #{tpu_custom_call.1} parent=47 // pred_check_branch
          %288 = sbr.rel (%p286) target = $region60
        $region59: #{tpu_custom_call.1} parent=47 // pred_region
          %289 = dma.done [#allocation6], 12288
        $region60: #{tpu_custom_call.1} parent=47 // pred_fallthru
          _
        %p290 = scmp.lt.s32.totalorder %s23, 1
        %s291 = scalar_select %p290, %s23, 1
        %s292 = smul.addr %s291, 2
        %s293 = smul.addr %s292, 4
        %s294 = scalar_lea.vmem %s0, %s293
        %p295 = pneg %p44
        %p296 = pneg %p41
        %p297 = pneg %p65
        %p298 = pneg %p62
        %p299 = pneg %p86
        %p300 = pneg %p83
        %p301 = pneg %p107
        %p302 = pneg %p104
        %p303 = pneg %p128
        %p304 = pneg %p125
        %p305 = pneg %p149
        %p306 = pneg %p146
        %p307 = pneg %p170
        %p308 = pneg %p167
        %p309 = pneg %p196
        %p310 = pneg %p193
        %s311 = sand.u32 %s183, 1
        %s312 = scalar_lea.sflag [#allocation4], %s311
        %s313 = sand.u32 %s183, 1
        %s314 = smul.addr %s313, 64
        %s315 = scalar_lea.vmem [#allocation8], %s314
        %p316 = scmp.lt.s32.totalorder %s23, 1
        %s317 = scalar_select %p316, %s23, 1
        %s318 = smul.addr %s317, 2
        %s319 = smul.addr %s318, 4
        %s320 = scalar_lea.vmem %s0, %s319
        %v322 = vld [vmem:[%s320] sm:$0xf]
        %v323 = vld [vmem:[%s320 + $0x4] sm:$0xf]
        %v324 = vld [vmem:[%s1] sm:$0xf]
        %v325 = vld [vmem:[%s1 + $0x4] sm:$0xf]
        %v326 = vld [vmem:[%s1 + $0x8] sm:$0xf]
        %v327 = vld [vmem:[%s1 + $0xc] sm:$0xf]
        %v332 = vunpack.c.l.b16 %v324
        %v333 = vunpack.c.l.b16 %v325
        %v334 = vunpack.c.l.b16 %v326
        %v335 = vunpack.c.l.b16 %v327
        %v336 = vpack.c.b16 %v333, %v332
        %v337 = vpack.c.b16 %v335, %v334
        %v340 = vunpack.c.l.b16 %v322
        %v341 = vunpack.c.l.b16 %v323
        %v342 = vpack.c.b16 %v341, %v340
        %vm344 = vcmask 130048
        %v346 = vsel %vm344, %v336, 0
        %v349 = vsel %vm344, %v337, 0
        %351 = vmatprep.subr.bf16.mxu0 0
        %352 = vmatpush1.bf16.msra.mxu0 %v342
        %353 = vmatprep.subr.bf16.mxu0 0
        %354 = vmatpush1.bf16.msra.mxu0 0
        %355 = vmatprep.subr.bf16.mxu0 0
        %356 = vmatpush1.bf16.msra.mxu0 0
        %357 = vmatprep.subr.bf16.mxu0 0
        %358 = vmatpush1.bf16.msra.mxu0 0
        %359 = vmatprep.subr.bf16.mxu0 0
        %360 = vmatpush1.bf16.msra.mxu0 0
        %361 = vmatprep.subr.bf16.mxu0 0
        %362 = vmatpush1.bf16.msra.mxu0 0
        %363 = vmatprep.subr.bf16.mxu0 0
        %364 = vmatpush1.bf16.msra.mxu0 0
        %365 = vmatprep.subr.bf16.mxu0 0
        %366 = vmatpush1.bf16.msra.mxu0 0
        %367 = vmatprep.subr.bf16.mxu0 0
        %368 = vmatpush1.bf16.msra.mxu0 0
        %369 = vmatprep.subr.bf16.mxu0 0
        %370 = vmatpush1.bf16.msra.mxu0 0
        %371 = vmatprep.subr.bf16.mxu0 0
        %372 = vmatpush1.bf16.msra.mxu0 0
        %373 = vmatprep.subr.bf16.mxu0 0
        %374 = vmatpush1.bf16.msra.mxu0 0
        %375 = vmatprep.subr.bf16.mxu0 0
        %376 = vmatpush1.bf16.msra.mxu0 0
        %377 = vmatprep.subr.bf16.mxu0 0
        %378 = vmatpush1.bf16.msra.mxu0 0
        %379 = vmatprep.subr.bf16.mxu0 0
        %380 = vmatpush1.bf16.msra.mxu0 0
        %381 = vmatprep.subr.bf16.mxu0 0
        %382 = vmatpush1.bf16.msra.mxu0 0
        %383 = vmatprep.mubr.bf16.mxu0 0
        %384 = vmatmul.mubr.bf16.gmra.mrb[0].mxu0 %v346
        %v385 = vpop.f32.mrb[0].mxu0
        %v386 = vadd.f32 0.0, %v385
        %v387 = vpop.f32.mrb[0].mxu0
        %v388 = vpop.f32.mrb[0].mxu0
        %v389 = vadd.f32 0.0, %v388
        %v390 = vpop.f32.mrb[0].mxu0
        %391 = vmatprep.mubr.bf16.mxu0 0
        %392 = vmatmul.mubr.bf16.gmra.mrb[0].mxu0 %v349
        %v393 = vpop.f32.mrb[0].mxu0
        %v394 = vadd.f32 0.0, %v393
        %v395 = vpop.f32.mrb[0].mxu0
        %v396 = vpop.f32.mrb[0].mxu0
        %v397 = vadd.f32 0.0, %v396
        %v398 = vpop.f32.mrb[0].mxu0
        %399 = vdwg.mxu0
        %v400 = vpack.c.bf16 %v389, %v386
        %v401 = vpack.c.bf16 %v397, %v394
        %v402 = vld [vmem:[#allocation2] sm:$0xf]
        %v403 = vld [vmem:[#allocation2 + $0x4] sm:$0xf]
        %v404 = vld [vmem:[#allocation2 + $0x8] sm:$0xf]
        %v405 = vld [vmem:[#allocation2 + $0xc] sm:$0xf]
        %v406 = vld [vmem:[#allocation2 + $0x10] sm:$0xf]
        %v407 = vld [vmem:[#allocation2 + $0x14] sm:$0xf]
        %v408 = vld [vmem:[#allocation2 + $0x18] sm:$0xf]
        %v409 = vld [vmem:[#allocation2 + $0x1c] sm:$0xf]
        %v418 = vunpack.c.l.b16 %v402
        %v419 = vunpack.c.l.b16 %v403
        %v420 = vunpack.c.l.b16 %v404
        %v421 = vunpack.c.l.b16 %v405
        %v422 = vunpack.c.l.b16 %v406
        %v423 = vunpack.c.l.b16 %v407
        %v424 = vunpack.c.l.b16 %v408
        %v425 = vunpack.c.l.b16 %v409
        %v426 = vpack.c.b16 %v419, %v418
        %v427 = vpack.c.b16 %v421, %v420
        %v428 = vpack.c.b16 %v423, %v422
        %v429 = vpack.c.b16 %v425, %v424
        %vm434 = vcmask 523264
        %v436 = vsel %vm434, %v400, 0
        %v439 = vsel %vm434, %v401, 0
        %441 = vmatprep.subr.bf16.mxu0 0
        %442 = vmatpush1.bf16.msra.mxu0 %v426
        %443 = vmatprep.subr.bf16.mxu0 0
        %444 = vmatpush1.bf16.msra.mxu0 %v427
        %445 = vmatprep.subr.bf16.mxu0 0
        %446 = vmatpush1.bf16.msra.mxu0 %v428
        %447 = vmatprep.subr.bf16.mxu0 0
        %448 = vmatpush1.bf16.msra.mxu0 %v429
        %449 = vmatprep.subr.bf16.mxu0 0
        %450 = vmatpush1.bf16.msra.mxu0 0
        %451 = vmatprep.subr.bf16.mxu0 0
        %452 = vmatpush1.bf16.msra.mxu0 0
        %453 = vmatprep.subr.bf16.mxu0 0
        %454 = vmatpush1.bf16.msra.mxu0 0
        %455 = vmatprep.subr.bf16.mxu0 0
        %456 = vmatpush1.bf16.msra.mxu0 0
        %457 = vmatprep.subr.bf16.mxu0 0
        %458 = vmatpush1.bf16.msra.mxu0 0
        %459 = vmatprep.subr.bf16.mxu0 0
        %460 = vmatpush1.bf16.msra.mxu0 0
        %461 = vmatprep.subr.bf16.mxu0 0
        %462 = vmatpush1.bf16.msra.mxu0 0
        %463 = vmatprep.subr.bf16.mxu0 0
        %464 = vmatpush1.bf16.msra.mxu0 0
        %465 = vmatprep.subr.bf16.mxu0 0
        %466 = vmatpush1.bf16.msra.mxu0 0
        %467 = vmatprep.subr.bf16.mxu0 0
        %468 = vmatpush1.bf16.msra.mxu0 0
        %469 = vmatprep.subr.bf16.mxu0 0
        %470 = vmatpush1.bf16.msra.mxu0 0
        %471 = vmatprep.subr.bf16.mxu0 0
        %472 = vmatpush1.bf16.msra.mxu0 0
        %473 = vmatprep.mubr.bf16.mxu0 0
        %474 = vmatmul.mubr.bf16.gmra.mrb[0].mxu0 %v436
        %v475 = vpop.f32.mrb[0].mxu0
        %v476 = vadd.f32 0.0, %v475
        %v477 = vpop.f32.mrb[0].mxu0
        %v478 = vpop.f32.mrb[0].mxu0
        %v479 = vadd.f32 0.0, %v478
        %v480 = vpop.f32.mrb[0].mxu0
        %481 = vmatprep.mubr.bf16.mxu0 0
        %482 = vmatmul.mubr.bf16.gmra.mrb[0].mxu0 %v439
        %v483 = vpop.f32.mrb[0].mxu0
        %v484 = vadd.f32 0.0, %v483
        %v485 = vpop.f32.mrb[0].mxu0
        %v486 = vpop.f32.mrb[0].mxu0
        %v487 = vadd.f32 0.0, %v486
        %v488 = vpop.f32.mrb[0].mxu0
        %489 = vdwg.mxu0
        %vm494 = vcmask 1040384
        %v495 = vrot.slane %v476, 7
        %v496 = vrot.slane %v479, 7
        %v497 = vsel %vm494, %v495, %v496
        %v498 = vrot.slane %v484, 7
        %v499 = vsel %vm494, %v496, %v498
        %v500 = vrot.slane %v487, 7
        %v501 = vsel %vm494, %v498, %v500
        %v507 = vsel %vm494, 0.0, %v495
        %v508 = vsel %vm494, %v500, 0.0
        %vm511 = vcmask 1046528
        %v512 = vrot.slane %v507, 1
        %v513 = vrot.slane %v497, 1
        %v514 = vsel %vm511, %v512, %v513
        %v515 = vrot.slane %v499, 1
        %v516 = vsel %vm511, %v513, %v515
        %v517 = vrot.slane %v501, 1
        %v518 = vsel %vm511, %v515, %v517
        %v519 = vrot.slane %v508, 1
        %v520 = vsel %vm511, %v517, %v519
        %vm525 = vcmask 1045504
        %v526 = vrot.slane %v507, 2
        %v527 = vrot.slane %v497, 2
        %v528 = vsel %vm525, %v526, %v527
        %v529 = vrot.slane %v499, 2
        %v530 = vsel %vm525, %v527, %v529
        %v531 = vrot.slane %v501, 2
        %v532 = vsel %vm525, %v529, %v531
        %v533 = vrot.slane %v508, 2
        %v534 = vsel %vm525, %v531, %v533
        %v539 = vpack.c.bf16 %v497, %v507
        %v540 = vpack.c.bf16 %v516, %v514
        %v541 = vpack.c.bf16 %v530, %v528
        %v542 = vpack.c.bf16 %v501, %v499
        %v543 = vpack.c.bf16 %v520, %v518
        %v544 = vpack.c.bf16 %v534, %v532
        %v545 = vld [vmem:[#allocation5] sm:$0xff]
        %v546 = vld [vmem:[#allocation5 + $0x8] sm:$0xff]
        %v547 = vld [vmem:[#allocation5 + $0x10] sm:$0xff]
        %v548 = vld [vmem:[#allocation5 + $0x18] sm:$0xff]
        %v549 = vld [vmem:[#allocation5 + $0x20] sm:$0xff]
        %v550 = vld [vmem:[#allocation5 + $0x28] sm:$0xff]
        %v551 = vld [vmem:[#allocation5 + $0x30] sm:$0xff]
        %v552 = vld [vmem:[#allocation5 + $0x38] sm:$0xff]
        %v553 = vld [vmem:[#allocation5 + $0x40] sm:$0xff]
        %v554 = vld [vmem:[#allocation5 + $0x48] sm:$0xff]
        %v555 = vld [vmem:[#allocation5 + $0x50] sm:$0xff]
        %v556 = vld [vmem:[#allocation5 + $0x58] sm:$0xff]
        %v557 = vld [vmem:[#allocation5 + $0x60] sm:$0xff]
        %v558 = vld [vmem:[#allocation5 + $0x68] sm:$0xff]
        %v559 = vld [vmem:[#allocation5 + $0x70] sm:$0xff]
        %v560 = vld [vmem:[#allocation5 + $0x78] sm:$0xff]
        %v561 = vld [vmem:[#allocation5 + $0x80] sm:$0xff]
        %v562 = vld [vmem:[#allocation5 + $0x88] sm:$0xff]
        %v563 = vld [vmem:[#allocation5 + $0x90] sm:$0xff]
        %v564 = vld [vmem:[#allocation5 + $0x98] sm:$0xff]
        %v565 = vld [vmem:[#allocation5 + $0xa0] sm:$0xff]
        %v566 = vld [vmem:[#allocation5 + $0xa8] sm:$0xff]
        %v567 = vld [vmem:[#allocation5 + $0xb0] sm:$0xff]
        %v568 = vld [vmem:[#allocation5 + $0xb8] sm:$0xff]
        %v569 = vld [vmem:[#allocation5 + $0xc0] sm:$0xff]
        %v570 = vld [vmem:[#allocation5 + $0xc8] sm:$0xff]
        %v571 = vld [vmem:[#allocation5 + $0xd0] sm:$0xff]
        %v572 = vld [vmem:[#allocation5 + $0xd8] sm:$0xff]
        %v573 = vld [vmem:[#allocation5 + $0xe0] sm:$0xff]
        %v574 = vld [vmem:[#allocation5 + $0xe8] sm:$0xff]
        %v575 = vld [vmem:[#allocation5 + $0xf0] sm:$0xff]
        %v576 = vld [vmem:[#allocation5 + $0xf8] sm:$0xff]
        %v577 = vld [vmem:[#allocation5 + $0x100] sm:$0xff]
        %v578 = vld [vmem:[#allocation5 + $0x108] sm:$0xff]
        %v579 = vld [vmem:[#allocation5 + $0x110] sm:$0xff]
        %v580 = vld [vmem:[#allocation5 + $0x118] sm:$0xff]
        %v581 = vld [vmem:[#allocation5 + $0x120] sm:$0xff]
        %v582 = vld [vmem:[#allocation5 + $0x128] sm:$0xff]
        %v583 = vld [vmem:[#allocation5 + $0x130] sm:$0xff]
        %v584 = vld [vmem:[#allocation5 + $0x138] sm:$0xff]
        %v585 = vld [vmem:[#allocation5 + $0x140] sm:$0xff]
        %v586 = vld [vmem:[#allocation5 + $0x148] sm:$0xff]
        %v587 = vld [vmem:[#allocation5 + $0x150] sm:$0xff]
        %v588 = vld [vmem:[#allocation5 + $0x158] sm:$0xff]
        %v589 = vld [vmem:[#allocation5 + $0x160] sm:$0xff]
        %v590 = vld [vmem:[#allocation5 + $0x168] sm:$0xff]
        %v591 = vld [vmem:[#allocation5 + $0x170] sm:$0xff]
        %v592 = vld [vmem:[#allocation5 + $0x178] sm:$0xff]
        %v593 = vld [vmem:[%s4] sm:$0x3]
        %v595 = vlaneseq
        %v596 = vshrl.u32 %v595, 7
        %v597 = vsub.s32 0, %v596
        %v598 = vrot.slane %v593, %v597
        %v599 = vlaneseq
        %v600 = vshrl.u32 %v599, 7
        %v601 = vsub.s32 1, %v600
        %v602 = vrot.slane %v593, %v601
        %v653 = vunpack.c.l.b16 %v545
        %v654 = vunpack.c.h.b16 %v545
        %v655 = vunpack.c.l.b16 %v546
        %v656 = vunpack.c.h.b16 %v546
        %v657 = vunpack.c.l.b16 %v547
        %v658 = vunpack.c.h.b16 %v547
        %v659 = vunpack.c.l.b16 %v548
        %v660 = vunpack.c.h.b16 %v548
        %v661 = vunpack.c.l.b16 %v549
        %v662 = vunpack.c.h.b16 %v549
        %v663 = vunpack.c.l.b16 %v550
        %v664 = vunpack.c.h.b16 %v550
        %v665 = vunpack.c.l.b16 %v551
        %v666 = vunpack.c.h.b16 %v551
        %v667 = vunpack.c.l.b16 %v552
        %v668 = vunpack.c.h.b16 %v552
        %v669 = vunpack.c.l.b16 %v553
        %v670 = vunpack.c.h.b16 %v553
        %v671 = vunpack.c.l.b16 %v554
        %v672 = vunpack.c.h.b16 %v554
        %v673 = vunpack.c.l.b16 %v555
        %v674 = vunpack.c.h.b16 %v555
        %v675 = vunpack.c.l.b16 %v556
        %v676 = vunpack.c.h.b16 %v556
        %v677 = vunpack.c.l.b16 %v557
        %v678 = vunpack.c.h.b16 %v557
        %v679 = vunpack.c.l.b16 %v558
        %v680 = vunpack.c.h.b16 %v558
        %v681 = vunpack.c.l.b16 %v559
        %v682 = vunpack.c.h.b16 %v559
        %v683 = vunpack.c.l.b16 %v560
        %v684 = vunpack.c.h.b16 %v560
        %v685 = vunpack.c.l.b16 %v561
        %v686 = vunpack.c.h.b16 %v561
        %v687 = vunpack.c.l.b16 %v562
        %v688 = vunpack.c.h.b16 %v562
        %v689 = vunpack.c.l.b16 %v563
        %v690 = vunpack.c.h.b16 %v563
        %v691 = vunpack.c.l.b16 %v564
        %v692 = vunpack.c.h.b16 %v564
        %v693 = vunpack.c.l.b16 %v565
        %v694 = vunpack.c.h.b16 %v565
        %v695 = vunpack.c.l.b16 %v566
        %v696 = vunpack.c.h.b16 %v566
        %v697 = vunpack.c.l.b16 %v567
        %v698 = vunpack.c.h.b16 %v567
        %v699 = vunpack.c.l.b16 %v568
        %v700 = vunpack.c.h.b16 %v568
        %v701 = vunpack.c.l.b16 %v569
        %v702 = vunpack.c.h.b16 %v569
        %v703 = vunpack.c.l.b16 %v570
        %v704 = vunpack.c.h.b16 %v570
        %v705 = vunpack.c.l.b16 %v571
        %v706 = vunpack.c.h.b16 %v571
        %v707 = vunpack.c.l.b16 %v572
        %v708 = vunpack.c.h.b16 %v572
        %v709 = vunpack.c.l.b16 %v573
        %v710 = vunpack.c.h.b16 %v573
        %v711 = vunpack.c.l.b16 %v574
        %v712 = vunpack.c.h.b16 %v574
        %v713 = vunpack.c.l.b16 %v575
        %v714 = vunpack.c.h.b16 %v575
        %v715 = vunpack.c.l.b16 %v576
        %v716 = vunpack.c.h.b16 %v576
        %v717 = vunpack.c.l.b16 %v577
        %v718 = vunpack.c.h.b16 %v577
        %v719 = vunpack.c.l.b16 %v578
        %v720 = vunpack.c.h.b16 %v578
        %v721 = vunpack.c.l.b16 %v579
        %v722 = vunpack.c.h.b16 %v579
        %v723 = vunpack.c.l.b16 %v580
        %v724 = vunpack.c.h.b16 %v580
        %v725 = vunpack.c.l.b16 %v581
        %v726 = vunpack.c.h.b16 %v581
        %v727 = vunpack.c.l.b16 %v582
        %v728 = vunpack.c.h.b16 %v582
        %v729 = vunpack.c.l.b16 %v583
        %v730 = vunpack.c.h.b16 %v583
        %v731 = vunpack.c.l.b16 %v584
        %v732 = vunpack.c.h.b16 %v584
        %v733 = vunpack.c.l.b16 %v585
        %v734 = vunpack.c.h.b16 %v585
        %v735 = vunpack.c.l.b16 %v586
        %v736 = vunpack.c.h.b16 %v586
        %v737 = vunpack.c.l.b16 %v587
        %v738 = vunpack.c.h.b16 %v587
        %v739 = vunpack.c.l.b16 %v588
        %v740 = vunpack.c.h.b16 %v588
        %v741 = vunpack.c.l.b16 %v589
        %v742 = vunpack.c.h.b16 %v589
        %v743 = vunpack.c.l.b16 %v590
        %v744 = vunpack.c.h.b16 %v590
        %v745 = vunpack.c.l.b16 %v591
        %v746 = vunpack.c.h.b16 %v591
        %v747 = vunpack.c.l.b16 %v592
        %v748 = vunpack.c.h.b16 %v592
        %v749 = vpack.c.b16 %v655, %v653
        %v750 = vpack.c.b16 %v656, %v654
        %v751 = vpack.c.b16 %v659, %v657
        %v752 = vpack.c.b16 %v660, %v658
        %v753 = vpack.c.b16 %v663, %v661
        %v754 = vpack.c.b16 %v664, %v662
        %v755 = vpack.c.b16 %v667, %v665
        %v756 = vpack.c.b16 %v668, %v666
        %v757 = vpack.c.b16 %v671, %v669
        %v758 = vpack.c.b16 %v672, %v670
        %v759 = vpack.c.b16 %v675, %v673
        %v760 = vpack.c.b16 %v676, %v674
        %v761 = vpack.c.b16 %v679, %v677
        %v762 = vpack.c.b16 %v680, %v678
        %v763 = vpack.c.b16 %v683, %v681
        %v764 = vpack.c.b16 %v684, %v682
        %v765 = vpack.c.b16 %v687, %v685
        %v766 = vpack.c.b16 %v688, %v686
        %v767 = vpack.c.b16 %v691, %v689
        %v768 = vpack.c.b16 %v692, %v690
        %v769 = vpack.c.b16 %v695, %v693
        %v770 = vpack.c.b16 %v696, %v694
        %v771 = vpack.c.b16 %v699, %v697
        %v772 = vpack.c.b16 %v700, %v698
        %v773 = vpack.c.b16 %v703, %v701
        %v774 = vpack.c.b16 %v704, %v702
        %v775 = vpack.c.b16 %v707, %v705
        %v776 = vpack.c.b16 %v708, %v706
        %v777 = vpack.c.b16 %v711, %v709
        %v778 = vpack.c.b16 %v712, %v710
        %v779 = vpack.c.b16 %v715, %v713
        %v780 = vpack.c.b16 %v716, %v714
        %v781 = vpack.c.b16 %v719, %v717
        %v782 = vpack.c.b16 %v720, %v718
        %v783 = vpack.c.b16 %v723, %v721
        %v784 = vpack.c.b16 %v724, %v722
        %v785 = vpack.c.b16 %v727, %v725
        %v786 = vpack.c.b16 %v728, %v726
        %v787 = vpack.c.b16 %v731, %v729
        %v788 = vpack.c.b16 %v732, %v730
        %v789 = vpack.c.b16 %v735, %v733
        %v790 = vpack.c.b16 %v736, %v734
        %v791 = vpack.c.b16 %v739, %v737
        %v792 = vpack.c.b16 %v740, %v738
        %v793 = vpack.c.b16 %v743, %v741
        %v794 = vpack.c.b16 %v744, %v742
        %v795 = vpack.c.b16 %v747, %v745
        %v796 = vpack.c.b16 %v748, %v746
        %845 = vmatprep.subr.bf16.mxu0 %v750
        %846 = vmatpush1.bf16.msra.mxu0 %v749
        %847 = vmatprep.subr.bf16.mxu0 %v752
        %848 = vmatpush1.bf16.msra.mxu0 %v751
        %849 = vmatprep.subr.bf16.mxu0 %v754
        %850 = vmatpush1.bf16.msra.mxu0 %v753
        %851 = vmatprep.subr.bf16.mxu0 %v756
        %852 = vmatpush1.bf16.msra.mxu0 %v755
        %853 = vmatprep.subr.bf16.mxu0 %v758
        %854 = vmatpush1.bf16.msra.mxu0 %v757
        %855 = vmatprep.subr.bf16.mxu0 %v760
        %856 = vmatpush1.bf16.msra.mxu0 %v759
        %857 = vmatprep.subr.bf16.mxu0 %v762
        %858 = vmatpush1.bf16.msra.mxu0 %v761
        %859 = vmatprep.subr.bf16.mxu0 %v764
        %860 = vmatpush1.bf16.msra.mxu0 %v763
        %861 = vmatprep.subr.bf16.mxu0 %v766
        %862 = vmatpush1.bf16.msra.mxu0 %v765
        %863 = vmatprep.subr.bf16.mxu0 %v768
        %864 = vmatpush1.bf16.msra.mxu0 %v767
        %865 = vmatprep.subr.bf16.mxu0 %v770
        %866 = vmatpush1.bf16.msra.mxu0 %v769
        %867 = vmatprep.subr.bf16.mxu0 %v772
        %868 = vmatpush1.bf16.msra.mxu0 %v771
        %869 = vmatprep.subr.bf16.mxu0 %v774
        %870 = vmatpush1.bf16.msra.mxu0 %v773
        %871 = vmatprep.subr.bf16.mxu0 %v776
        %872 = vmatpush1.bf16.msra.mxu0 %v775
        %873 = vmatprep.subr.bf16.mxu0 %v778
        %874 = vmatpush1.bf16.msra.mxu0 %v777
        %875 = vmatprep.subr.bf16.mxu0 %v780
        %876 = vmatpush1.bf16.msra.mxu0 %v779
        %877 = vmatprep.mubr.bf16.mxu0 %v540
        %878 = vmatmul.mubr.bf16.gmra.mrb[0].mxu0 %v539
        %v879 = vpop.f32.mrb[0].mxu0
        %v880 = vadd.f32 %v598, %v879
        %v881 = vpop.f32.mrb[0].mxu0
        %v882 = vadd.f32 %v602, %v881
        %v883 = vpop.f32.mrb[0].mxu0
        %v884 = vadd.f32 %v598, %v883
        %v885 = vpop.f32.mrb[0].mxu0
        %v886 = vadd.f32 %v602, %v885
        %887 = vmatprep.mubr.bf16.mxu0 %v543
        %888 = vmatmul.mubr.bf16.gmra.mrb[0].mxu0 %v542
        %v889 = vpop.f32.mrb[0].mxu0
        %v890 = vadd.f32 %v598, %v889
        %v891 = vpop.f32.mrb[0].mxu0
        %v892 = vadd.f32 %v602, %v891
        %v893 = vpop.f32.mrb[0].mxu0
        %v894 = vadd.f32 %v598, %v893
        %v895 = vpop.f32.mrb[0].mxu0
        %v896 = vadd.f32 %v602, %v895
        %897 = vdwg.mxu0
        %898 = vmatprep.subr.bf16.mxu0 %v782
        %899 = vmatpush1.bf16.msra.mxu0 %v781
        %900 = vmatprep.subr.bf16.mxu0 %v784
        %901 = vmatpush1.bf16.msra.mxu0 %v783
        %902 = vmatprep.subr.bf16.mxu0 %v786
        %903 = vmatpush1.bf16.msra.mxu0 %v785
        %904 = vmatprep.subr.bf16.mxu0 %v788
        %905 = vmatpush1.bf16.msra.mxu0 %v787
        %906 = vmatprep.subr.bf16.mxu0 %v790
        %907 = vmatpush1.bf16.msra.mxu0 %v789
        %908 = vmatprep.subr.bf16.mxu0 %v792
        %909 = vmatpush1.bf16.msra.mxu0 %v791
        %910 = vmatprep.subr.bf16.mxu0 %v794
        %911 = vmatpush1.bf16.msra.mxu0 %v793
        %912 = vmatprep.subr.bf16.mxu0 %v796
        %913 = vmatpush1.bf16.msra.mxu0 %v795
        %914 = vmatprep.subr.bf16.mxu0 0
        %915 = vmatpush1.bf16.msra.mxu0 0
        %916 = vmatprep.subr.bf16.mxu0 0
        %917 = vmatpush1.bf16.msra.mxu0 0
        %918 = vmatprep.subr.bf16.mxu0 0
        %919 = vmatpush1.bf16.msra.mxu0 0
        %920 = vmatprep.subr.bf16.mxu0 0
        %921 = vmatpush1.bf16.msra.mxu0 0
        %922 = vmatprep.subr.bf16.mxu0 0
        %923 = vmatpush1.bf16.msra.mxu0 0
        %924 = vmatprep.subr.bf16.mxu0 0
        %925 = vmatpush1.bf16.msra.mxu0 0
        %926 = vmatprep.subr.bf16.mxu0 0
        %927 = vmatpush1.bf16.msra.mxu0 0
        %928 = vmatprep.subr.bf16.mxu0 0
        %929 = vmatpush1.bf16.msra.mxu0 0
        %930 = vmatprep.mubr.bf16.mxu0 0
        %931 = vmatmul.mubr.bf16.gmra.mrb[0].mxu0 %v541
        %v932 = vpop.f32.mrb[0].mxu0
        %v933 = vadd.f32 %v880, %v932
        %v934 = vpop.f32.mrb[0].mxu0
        %v935 = vadd.f32 %v882, %v934
        %v936 = vpop.f32.mrb[0].mxu0
        %v937 = vadd.f32 %v884, %v936
        %v938 = vpop.f32.mrb[0].mxu0
        %v939 = vadd.f32 %v886, %v938
        %940 = vmatprep.mubr.bf16.mxu0 0
        %941 = vmatmul.mubr.bf16.gmra.mrb[0].mxu0 %v544
        %v942 = vpop.f32.mrb[0].mxu0
        %v943 = vadd.f32 %v890, %v942
        %v944 = vpop.f32.mrb[0].mxu0
        %v945 = vadd.f32 %v892, %v944
        %v946 = vpop.f32.mrb[0].mxu0
        %v947 = vadd.f32 %v894, %v946
        %v948 = vpop.f32.mrb[0].mxu0
        %v949 = vadd.f32 %v896, %v948
        %950 = vdwg.mxu0
        %v959 = vrot.slane %v933, 7
        %v960 = vrot.slane %v935, 7
        %v961 = vrot.slane %v937, 7
        %v962 = vsel %vm494, %v959, %v961
        %v963 = vrot.slane %v939, 7
        %v964 = vsel %vm494, %v960, %v963
        %v965 = vrot.slane %v943, 7
        %v966 = vsel %vm494, %v961, %v965
        %v967 = vrot.slane %v945, 7
        %v968 = vsel %vm494, %v963, %v967
        %v969 = vrot.slane %v947, 7
        %v970 = vsel %vm494, %v965, %v969
        %v971 = vrot.slane %v949, 7
        %v972 = vsel %vm494, %v967, %v971
        %v983 = vsel %vm494, 0.0, %v959
        %v984 = vsel %vm494, 0.0, %v960
        %v985 = vsel %vm494, %v969, 0.0
        %v986 = vsel %vm494, %v971, 0.0
        %v991 = vrot.slane %v983, 1
        %v992 = vrot.slane %v962, 1
        %v993 = vsel %vm511, %v991, %v992
        %v994 = vrot.slane %v984, 1
        %v995 = vrot.slane %v964, 1
        %v996 = vsel %vm511, %v994, %v995
        %v997 = vrot.slane %v966, 1
        %v998 = vsel %vm511, %v992, %v997
        %v999 = vrot.slane %v968, 1
        %v1000 = vsel %vm511, %v995, %v999
        %v1001 = vrot.slane %v970, 1
        %v1002 = vsel %vm511, %v997, %v1001
        %v1003 = vrot.slane %v972, 1
        %v1004 = vsel %vm511, %v999, %v1003
        %v1005 = vrot.slane %v985, 1
        %v1006 = vsel %vm511, %v1001, %v1005
        %v1007 = vrot.slane %v986, 1
        %v1008 = vsel %vm511, %v1003, %v1007
        %v1017 = vrot.slane %v983, 2
        %v1018 = vrot.slane %v962, 2
        %v1019 = vsel %vm525, %v1017, %v1018
        %v1020 = vrot.slane %v984, 2
        %v1021 = vrot.slane %v964, 2
        %v1022 = vsel %vm525, %v1020, %v1021
        %v1023 = vrot.slane %v966, 2
        %v1024 = vsel %vm525, %v1018, %v1023
        %v1025 = vrot.slane %v968, 2
        %v1026 = vsel %vm525, %v1021, %v1025
        %v1027 = vrot.slane %v970, 2
        %v1028 = vsel %vm525, %v1023, %v1027
        %v1029 = vrot.slane %v972, 2
        %v1030 = vsel %vm525, %v1025, %v1029
        %v1031 = vrot.slane %v985, 2
        %v1032 = vsel %vm525, %v1027, %v1031
        %v1033 = vrot.slane %v986, 2
        %v1034 = vsel %vm525, %v1029, %v1033
        %v1043 = vpack.c.bf16 %v962, %v983
        %v1044 = vpack.c.bf16 %v964, %v984
        %v1045 = vpack.c.bf16 %v998, %v993
        %v1046 = vpack.c.bf16 %v1000, %v996
        %v1047 = vpack.c.bf16 %v1024, %v1019
        %v1048 = vpack.c.bf16 %v1026, %v1022
        %v1049 = vpack.c.bf16 %v970, %v966
        %v1050 = vpack.c.bf16 %v972, %v968
        %v1051 = vpack.c.bf16 %v1006, %v1002
        %v1052 = vpack.c.bf16 %v1008, %v1004
        %v1053 = vpack.c.bf16 %v1032, %v1028
        %v1054 = vpack.c.bf16 %v1034, %v1030
        %v1055 = vld [vmem:[#allocation7] sm:$0xff]
        %v1056 = vld [vmem:[#allocation7 + $0x8] sm:$0xff]
        %v1057 = vld [vmem:[#allocation7 + $0x10] sm:$0xff]
        %v1058 = vld [vmem:[#allocation7 + $0x18] sm:$0xff]
        %v1059 = vld [vmem:[#allocation7 + $0x20] sm:$0xff]
        %v1060 = vld [vmem:[#allocation7 + $0x28] sm:$0xff]
        %v1061 = vld [vmem:[#allocation7 + $0x30] sm:$0xff]
        %v1062 = vld [vmem:[#allocation7 + $0x38] sm:$0xff]
        %v1063 = vld [vmem:[#allocation7 + $0x40] sm:$0xff]
        %v1064 = vld [vmem:[#allocation7 + $0x48] sm:$0xff]
        %v1065 = vld [vmem:[#allocation7 + $0x50] sm:$0xff]
        %v1066 = vld [vmem:[#allocation7 + $0x58] sm:$0xff]
        %v1067 = vld [vmem:[#allocation7 + $0x60] sm:$0xff]
        %v1068 = vld [vmem:[#allocation7 + $0x68] sm:$0xff]
        %v1069 = vld [vmem:[#allocation7 + $0x70] sm:$0xff]
        %v1070 = vld [vmem:[#allocation7 + $0x78] sm:$0xff]
        %v1071 = vld [vmem:[#allocation7 + $0x80] sm:$0xff]
        %v1072 = vld [vmem:[#allocation7 + $0x88] sm:$0xff]
        %v1073 = vld [vmem:[#allocation7 + $0x90] sm:$0xff]
        %v1074 = vld [vmem:[#allocation7 + $0x98] sm:$0xff]
        %v1075 = vld [vmem:[#allocation7 + $0xa0] sm:$0xff]
        %v1076 = vld [vmem:[#allocation7 + $0xa8] sm:$0xff]
        %v1077 = vld [vmem:[#allocation7 + $0xb0] sm:$0xff]
        %v1078 = vld [vmem:[#allocation7 + $0xb8] sm:$0xff]
        %v1079 = vld [vmem:[#allocation7 + $0xc0] sm:$0xff]
        %v1080 = vld [vmem:[#allocation7 + $0xc8] sm:$0xff]
        %v1081 = vld [vmem:[#allocation7 + $0xd0] sm:$0xff]
        %v1082 = vld [vmem:[#allocation7 + $0xd8] sm:$0xff]
        %v1083 = vld [vmem:[#allocation7 + $0xe0] sm:$0xff]
        %v1084 = vld [vmem:[#allocation7 + $0xe8] sm:$0xff]
        %v1085 = vld [vmem:[#allocation7 + $0xf0] sm:$0xff]
        %v1086 = vld [vmem:[#allocation7 + $0xf8] sm:$0xff]
        %v1087 = vld [vmem:[#allocation7 + $0x100] sm:$0xff]
        %v1088 = vld [vmem:[#allocation7 + $0x108] sm:$0xff]
        %v1089 = vld [vmem:[#allocation7 + $0x110] sm:$0xff]
        %v1090 = vld [vmem:[#allocation7 + $0x118] sm:$0xff]
        %v1091 = vld [vmem:[#allocation7 + $0x120] sm:$0xff]
        %v1092 = vld [vmem:[#allocation7 + $0x128] sm:$0xff]
        %v1093 = vld [vmem:[#allocation7 + $0x130] sm:$0xff]
        %v1094 = vld [vmem:[#allocation7 + $0x138] sm:$0xff]
        %v1095 = vld [vmem:[#allocation7 + $0x140] sm:$0xff]
        %v1096 = vld [vmem:[#allocation7 + $0x148] sm:$0xff]
        %v1097 = vld [vmem:[#allocation7 + $0x150] sm:$0xff]
        %v1098 = vld [vmem:[#allocation7 + $0x158] sm:$0xff]
        %v1099 = vld [vmem:[#allocation7 + $0x160] sm:$0xff]
        %v1100 = vld [vmem:[#allocation7 + $0x168] sm:$0xff]
        %v1101 = vld [vmem:[#allocation7 + $0x170] sm:$0xff]
        %v1102 = vld [vmem:[#allocation7 + $0x178] sm:$0xff]
        %v1103 = vld [vmem:[#allocation7 + $0x180] sm:$0xff]
        %v1104 = vld [vmem:[#allocation7 + $0x188] sm:$0xff]
        %v1105 = vld [vmem:[#allocation7 + $0x190] sm:$0xff]
        %v1106 = vld [vmem:[#allocation7 + $0x198] sm:$0xff]
        %v1107 = vld [vmem:[#allocation7 + $0x1a0] sm:$0xff]
        %v1108 = vld [vmem:[#allocation7 + $0x1a8] sm:$0xff]
        %v1109 = vld [vmem:[#allocation7 + $0x1b0] sm:$0xff]
        %v1110 = vld [vmem:[#allocation7 + $0x1b8] sm:$0xff]
        %v1111 = vld [vmem:[#allocation7 + $0x1c0] sm:$0xff]
        %v1112 = vld [vmem:[#allocation7 + $0x1c8] sm:$0xff]
        %v1113 = vld [vmem:[#allocation7 + $0x1d0] sm:$0xff]
        %v1114 = vld [vmem:[#allocation7 + $0x1d8] sm:$0xff]
        %v1115 = vld [vmem:[#allocation7 + $0x1e0] sm:$0xff]
        %v1116 = vld [vmem:[#allocation7 + $0x1e8] sm:$0xff]
        %v1117 = vld [vmem:[#allocation7 + $0x1f0] sm:$0xff]
        %v1118 = vld [vmem:[#allocation7 + $0x1f8] sm:$0xff]
        %v1119 = vld [vmem:[#allocation7 + $0x200] sm:$0xff]
        %v1120 = vld [vmem:[#allocation7 + $0x208] sm:$0xff]
        %v1121 = vld [vmem:[#allocation7 + $0x210] sm:$0xff]
        %v1122 = vld [vmem:[#allocation7 + $0x218] sm:$0xff]
        %v1123 = vld [vmem:[#allocation7 + $0x220] sm:$0xff]
        %v1124 = vld [vmem:[#allocation7 + $0x228] sm:$0xff]
        %v1125 = vld [vmem:[#allocation7 + $0x230] sm:$0xff]
        %v1126 = vld [vmem:[#allocation7 + $0x238] sm:$0xff]
        %v1127 = vld [vmem:[#allocation7 + $0x240] sm:$0xff]
        %v1128 = vld [vmem:[#allocation7 + $0x248] sm:$0xff]
        %v1129 = vld [vmem:[#allocation7 + $0x250] sm:$0xff]
        %v1130 = vld [vmem:[#allocation7 + $0x258] sm:$0xff]
        %v1131 = vld [vmem:[#allocation7 + $0x260] sm:$0xff]
        %v1132 = vld [vmem:[#allocation7 + $0x268] sm:$0xff]
        %v1133 = vld [vmem:[#allocation7 + $0x270] sm:$0xff]
        %v1134 = vld [vmem:[#allocation7 + $0x278] sm:$0xff]
        %v1135 = vld [vmem:[#allocation7 + $0x280] sm:$0xff]
        %v1136 = vld [vmem:[#allocation7 + $0x288] sm:$0xff]
        %v1137 = vld [vmem:[#allocation7 + $0x290] sm:$0xff]
        %v1138 = vld [vmem:[#allocation7 + $0x298] sm:$0xff]
        %v1139 = vld [vmem:[#allocation7 + $0x2a0] sm:$0xff]
        %v1140 = vld [vmem:[#allocation7 + $0x2a8] sm:$0xff]
        %v1141 = vld [vmem:[#allocation7 + $0x2b0] sm:$0xff]
        %v1142 = vld [vmem:[#allocation7 + $0x2b8] sm:$0xff]
        %v1143 = vld [vmem:[#allocation7 + $0x2c0] sm:$0xff]
        %v1144 = vld [vmem:[#allocation7 + $0x2c8] sm:$0xff]
        %v1145 = vld [vmem:[#allocation7 + $0x2d0] sm:$0xff]
        %v1146 = vld [vmem:[#allocation7 + $0x2d8] sm:$0xff]
        %v1147 = vld [vmem:[#allocation7 + $0x2e0] sm:$0xff]
        %v1148 = vld [vmem:[#allocation7 + $0x2e8] sm:$0xff]
        %v1149 = vld [vmem:[#allocation7 + $0x2f0] sm:$0xff]
        %v1150 = vld [vmem:[#allocation7 + $0x2f8] sm:$0xff]
        %v1151 = vld [vmem:[%s6] sm:$0x3]
        %v1153 = vlaneseq
        %v1154 = vshrl.u32 %v1153, 7
        %v1155 = vsub.s32 0, %v1154
        %v1156 = vrot.slane %v1151, %v1155
        %v1157 = vlaneseq
        %v1158 = vshrl.u32 %v1157, 7
        %v1159 = vsub.s32 1, %v1158
        %v1160 = vrot.slane %v1151, %v1159
        %v1259 = vunpack.c.l.b16 %v1055
        %v1260 = vunpack.c.h.b16 %v1055
        %v1261 = vunpack.c.l.b16 %v1056
        %v1262 = vunpack.c.h.b16 %v1056
        %v1263 = vunpack.c.l.b16 %v1057
        %v1264 = vunpack.c.h.b16 %v1057
        %v1265 = vunpack.c.l.b16 %v1058
        %v1266 = vunpack.c.h.b16 %v1058
        %v1267 = vunpack.c.l.b16 %v1059
        %v1268 = vunpack.c.h.b16 %v1059
        %v1269 = vunpack.c.l.b16 %v1060
        %v1270 = vunpack.c.h.b16 %v1060
        %v1271 = vunpack.c.l.b16 %v1061
        %v1272 = vunpack.c.h.b16 %v1061
        %v1273 = vunpack.c.l.b16 %v1062
        %v1274 = vunpack.c.h.b16 %v1062
        %v1275 = vunpack.c.l.b16 %v1063
        %v1276 = vunpack.c.h.b16 %v1063
        %v1277 = vunpack.c.l.b16 %v1064
        %v1278 = vunpack.c.h.b16 %v1064
        %v1279 = vunpack.c.l.b16 %v1065
        %v1280 = vunpack.c.h.b16 %v1065
        %v1281 = vunpack.c.l.b16 %v1066
        %v1282 = vunpack.c.h.b16 %v1066
        %v1283 = vunpack.c.l.b16 %v1067
        %v1284 = vunpack.c.h.b16 %v1067
        %v1285 = vunpack.c.l.b16 %v1068
        %v1286 = vunpack.c.h.b16 %v1068
        %v1287 = vunpack.c.l.b16 %v1069
        %v1288 = vunpack.c.h.b16 %v1069
        %v1289 = vunpack.c.l.b16 %v1070
        %v1290 = vunpack.c.h.b16 %v1070
        %v1291 = vunpack.c.l.b16 %v1071
        %v1292 = vunpack.c.h.b16 %v1071
        %v1293 = vunpack.c.l.b16 %v1072
        %v1294 = vunpack.c.h.b16 %v1072
        %v1295 = vunpack.c.l.b16 %v1073
        %v1296 = vunpack.c.h.b16 %v1073
        %v1297 = vunpack.c.l.b16 %v1074
        %v1298 = vunpack.c.h.b16 %v1074
        %v1299 = vunpack.c.l.b16 %v1075
        %v1300 = vunpack.c.h.b16 %v1075
        %v1301 = vunpack.c.l.b16 %v1076
        %v1302 = vunpack.c.h.b16 %v1076
        %v1303 = vunpack.c.l.b16 %v1077
        %v1304 = vunpack.c.h.b16 %v1077
        %v1305 = vunpack.c.l.b16 %v1078
        %v1306 = vunpack.c.h.b16 %v1078
        %v1307 = vunpack.c.l.b16 %v1079
        %v1308 = vunpack.c.h.b16 %v1079
        %v1309 = vunpack.c.l.b16 %v1080
        %v1310 = vunpack.c.h.b16 %v1080
        %v1311 = vunpack.c.l.b16 %v1081
        %v1312 = vunpack.c.h.b16 %v1081
        %v1313 = vunpack.c.l.b16 %v1082
        %v1314 = vunpack.c.h.b16 %v1082
        %v1315 = vunpack.c.l.b16 %v1083
        %v1316 = vunpack.c.h.b16 %v1083
        %v1317 = vunpack.c.l.b16 %v1084
        %v1318 = vunpack.c.h.b16 %v1084
        %v1319 = vunpack.c.l.b16 %v1085
        %v1320 = vunpack.c.h.b16 %v1085
        %v1321 = vunpack.c.l.b16 %v1086
        %v1322 = vunpack.c.h.b16 %v1086
        %v1323 = vunpack.c.l.b16 %v1087
        %v1324 = vunpack.c.h.b16 %v1087
        %v1325 = vunpack.c.l.b16 %v1088
        %v1326 = vunpack.c.h.b16 %v1088
        %v1327 = vunpack.c.l.b16 %v1089
        %v1328 = vunpack.c.h.b16 %v1089
        %v1329 = vunpack.c.l.b16 %v1090
        %v1330 = vunpack.c.h.b16 %v1090
        %v1331 = vunpack.c.l.b16 %v1091
        %v1332 = vunpack.c.h.b16 %v1091
        %v1333 = vunpack.c.l.b16 %v1092
        %v1334 = vunpack.c.h.b16 %v1092
        %v1335 = vunpack.c.l.b16 %v1093
        %v1336 = vunpack.c.h.b16 %v1093
        %v1337 = vunpack.c.l.b16 %v1094
        %v1338 = vunpack.c.h.b16 %v1094
        %v1339 = vunpack.c.l.b16 %v1095
        %v1340 = vunpack.c.h.b16 %v1095
        %v1341 = vunpack.c.l.b16 %v1096
        %v1342 = vunpack.c.h.b16 %v1096
        %v1343 = vunpack.c.l.b16 %v1097
        %v1344 = vunpack.c.h.b16 %v1097
        %v1345 = vunpack.c.l.b16 %v1098
        %v1346 = vunpack.c.h.b16 %v1098
        %v1347 = vunpack.c.l.b16 %v1099
        %v1348 = vunpack.c.h.b16 %v1099
        %v1349 = vunpack.c.l.b16 %v1100
        %v1350 = vunpack.c.h.b16 %v1100
        %v1351 = vunpack.c.l.b16 %v1101
        %v1352 = vunpack.c.h.b16 %v1101
        %v1353 = vunpack.c.l.b16 %v1102
        %v1354 = vunpack.c.h.b16 %v1102
        %v1355 = vunpack.c.l.b16 %v1103
        %v1356 = vunpack.c.h.b16 %v1103
        %v1357 = vunpack.c.l.b16 %v1104
        %v1358 = vunpack.c.h.b16 %v1104
        %v1359 = vunpack.c.l.b16 %v1105
        %v1360 = vunpack.c.h.b16 %v1105
        %v1361 = vunpack.c.l.b16 %v1106
        %v1362 = vunpack.c.h.b16 %v1106
        %v1363 = vunpack.c.l.b16 %v1107
        %v1364 = vunpack.c.h.b16 %v1107
        %v1365 = vunpack.c.l.b16 %v1108
        %v1366 = vunpack.c.h.b16 %v1108
        %v1367 = vunpack.c.l.b16 %v1109
        %v1368 = vunpack.c.h.b16 %v1109
        %v1369 = vunpack.c.l.b16 %v1110
        %v1370 = vunpack.c.h.b16 %v1110
        %v1371 = vunpack.c.l.b16 %v1111
        %v1372 = vunpack.c.h.b16 %v1111
        %v1373 = vunpack.c.l.b16 %v1112
        %v1374 = vunpack.c.h.b16 %v1112
        %v1375 = vunpack.c.l.b16 %v1113
        %v1376 = vunpack.c.h.b16 %v1113
        %v1377 = vunpack.c.l.b16 %v1114
        %v1378 = vunpack.c.h.b16 %v1114
        %v1379 = vunpack.c.l.b16 %v1115
        %v1380 = vunpack.c.h.b16 %v1115
        %v1381 = vunpack.c.l.b16 %v1116
        %v1382 = vunpack.c.h.b16 %v1116
        %v1383 = vunpack.c.l.b16 %v1117
        %v1384 = vunpack.c.h.b16 %v1117
        %v1385 = vunpack.c.l.b16 %v1118
        %v1386 = vunpack.c.h.b16 %v1118
        %v1387 = vunpack.c.l.b16 %v1119
        %v1388 = vunpack.c.h.b16 %v1119
        %v1389 = vunpack.c.l.b16 %v1120
        %v1390 = vunpack.c.h.b16 %v1120
        %v1391 = vunpack.c.l.b16 %v1121
        %v1392 = vunpack.c.h.b16 %v1121
        %v1393 = vunpack.c.l.b16 %v1122
        %v1394 = vunpack.c.h.b16 %v1122
        %v1395 = vunpack.c.l.b16 %v1123
        %v1396 = vunpack.c.h.b16 %v1123
        %v1397 = vunpack.c.l.b16 %v1124
        %v1398 = vunpack.c.h.b16 %v1124
        %v1399 = vunpack.c.l.b16 %v1125
        %v1400 = vunpack.c.h.b16 %v1125
        %v1401 = vunpack.c.l.b16 %v1126
        %v1402 = vunpack.c.h.b16 %v1126
        %v1403 = vunpack.c.l.b16 %v1127
        %v1404 = vunpack.c.h.b16 %v1127
        %v1405 = vunpack.c.l.b16 %v1128
        %v1406 = vunpack.c.h.b16 %v1128
        %v1407 = vunpack.c.l.b16 %v1129
        %v1408 = vunpack.c.h.b16 %v1129
        %v1409 = vunpack.c.l.b16 %v1130
        %v1410 = vunpack.c.h.b16 %v1130
        %v1411 = vunpack.c.l.b16 %v1131
        %v1412 = vunpack.c.h.b16 %v1131
        %v1413 = vunpack.c.l.b16 %v1132
        %v1414 = vunpack.c.h.b16 %v1132
        %v1415 = vunpack.c.l.b16 %v1133
        %v1416 = vunpack.c.h.b16 %v1133
        %v1417 = vunpack.c.l.b16 %v1134
        %v1418 = vunpack.c.h.b16 %v1134
        %v1419 = vunpack.c.l.b16 %v1135
        %v1420 = vunpack.c.h.b16 %v1135
        %v1421 = vunpack.c.l.b16 %v1136
        %v1422 = vunpack.c.h.b16 %v1136
        %v1423 = vunpack.c.l.b16 %v1137
        %v1424 = vunpack.c.h.b16 %v1137
        %v1425 = vunpack.c.l.b16 %v1138
        %v1426 = vunpack.c.h.b16 %v1138
        %v1427 = vunpack.c.l.b16 %v1139
        %v1428 = vunpack.c.h.b16 %v1139
        %v1429 = vunpack.c.l.b16 %v1140
        %v1430 = vunpack.c.h.b16 %v1140
        %v1431 = vunpack.c.l.b16 %v1141
        %v1432 = vunpack.c.h.b16 %v1141
        %v1433 = vunpack.c.l.b16 %v1142
        %v1434 = vunpack.c.h.b16 %v1142
        %v1435 = vunpack.c.l.b16 %v1143
        %v1436 = vunpack.c.h.b16 %v1143
        %v1437 = vunpack.c.l.b16 %v1144
        %v1438 = vunpack.c.h.b16 %v1144
        %v1439 = vunpack.c.l.b16 %v1145
        %v1440 = vunpack.c.h.b16 %v1145
        %v1441 = vunpack.c.l.b16 %v1146
        %v1442 = vunpack.c.h.b16 %v1146
        %v1443 = vunpack.c.l.b16 %v1147
        %v1444 = vunpack.c.h.b16 %v1147
        %v1445 = vunpack.c.l.b16 %v1148
        %v1446 = vunpack.c.h.b16 %v1148
        %v1447 = vunpack.c.l.b16 %v1149
        %v1448 = vunpack.c.h.b16 %v1149
        %v1449 = vunpack.c.l.b16 %v1150
        %v1450 = vunpack.c.h.b16 %v1150
        %v1451 = vpack.c.b16 %v1261, %v1259
        %v1452 = vpack.c.b16 %v1262, %v1260
        %v1453 = vpack.c.b16 %v1265, %v1263
        %v1454 = vpack.c.b16 %v1266, %v1264
        %v1455 = vpack.c.b16 %v1269, %v1267
        %v1456 = vpack.c.b16 %v1270, %v1268
        %v1457 = vpack.c.b16 %v1273, %v1271
        %v1458 = vpack.c.b16 %v1274, %v1272
        %v1459 = vpack.c.b16 %v1277, %v1275
        %v1460 = vpack.c.b16 %v1278, %v1276
        %v1461 = vpack.c.b16 %v1281, %v1279
        %v1462 = vpack.c.b16 %v1282, %v1280
        %v1463 = vpack.c.b16 %v1285, %v1283
        %v1464 = vpack.c.b16 %v1286, %v1284
        %v1465 = vpack.c.b16 %v1289, %v1287
        %v1466 = vpack.c.b16 %v1290, %v1288
        %v1467 = vpack.c.b16 %v1293, %v1291
        %v1468 = vpack.c.b16 %v1294, %v1292
        %v1469 = vpack.c.b16 %v1297, %v1295
        %v1470 = vpack.c.b16 %v1298, %v1296
        %v1471 = vpack.c.b16 %v1301, %v1299
        %v1472 = vpack.c.b16 %v1302, %v1300
        %v1473 = vpack.c.b16 %v1305, %v1303
        %v1474 = vpack.c.b16 %v1306, %v1304
        %v1475 = vpack.c.b16 %v1309, %v1307
        %v1476 = vpack.c.b16 %v1310, %v1308
        %v1477 = vpack.c.b16 %v1313, %v1311
        %v1478 = vpack.c.b16 %v1314, %v1312
        %v1479 = vpack.c.b16 %v1317, %v1315
        %v1480 = vpack.c.b16 %v1318, %v1316
        %v1481 = vpack.c.b16 %v1321, %v1319
        %v1482 = vpack.c.b16 %v1322, %v1320
        %v1483 = vpack.c.b16 %v1325, %v1323
        %v1484 = vpack.c.b16 %v1326, %v1324
        %v1485 = vpack.c.b16 %v1329, %v1327
        %v1486 = vpack.c.b16 %v1330, %v1328
        %v1487 = vpack.c.b16 %v1333, %v1331
        %v1488 = vpack.c.b16 %v1334, %v1332
        %v1489 = vpack.c.b16 %v1337, %v1335
        %v1490 = vpack.c.b16 %v1338, %v1336
        %v1491 = vpack.c.b16 %v1341, %v1339
        %v1492 = vpack.c.b16 %v1342, %v1340
        %v1493 = vpack.c.b16 %v1345, %v1343
        %v1494 = vpack.c.b16 %v1346, %v1344
        %v1495 = vpack.c.b16 %v1349, %v1347
        %v1496 = vpack.c.b16 %v1350, %v1348
        %v1497 = vpack.c.b16 %v1353, %v1351
        %v1498 = vpack.c.b16 %v1354, %v1352
        %v1499 = vpack.c.b16 %v1357, %v1355
        %v1500 = vpack.c.b16 %v1358, %v1356
        %v1501 = vpack.c.b16 %v1361, %v1359
        %v1502 = vpack.c.b16 %v1362, %v1360
        %v1503 = vpack.c.b16 %v1365, %v1363
        %v1504 = vpack.c.b16 %v1366, %v1364
        %v1505 = vpack.c.b16 %v1369, %v1367
        %v1506 = vpack.c.b16 %v1370, %v1368
        %v1507 = vpack.c.b16 %v1373, %v1371
        %v1508 = vpack.c.b16 %v1374, %v1372
        %v1509 = vpack.c.b16 %v1377, %v1375
        %v1510 = vpack.c.b16 %v1378, %v1376
        %v1511 = vpack.c.b16 %v1381, %v1379
        %v1512 = vpack.c.b16 %v1382, %v1380
        %v1513 = vpack.c.b16 %v1385, %v1383
        %v1514 = vpack.c.b16 %v1386, %v1384
        %v1515 = vpack.c.b16 %v1389, %v1387
        %v1516 = vpack.c.b16 %v1390, %v1388
        %v1517 = vpack.c.b16 %v1393, %v1391
        %v1518 = vpack.c.b16 %v1394, %v1392
        %v1519 = vpack.c.b16 %v1397, %v1395
        %v1520 = vpack.c.b16 %v1398, %v1396
        %v1521 = vpack.c.b16 %v1401, %v1399
        %v1522 = vpack.c.b16 %v1402, %v1400
        %v1523 = vpack.c.b16 %v1405, %v1403
        %v1524 = vpack.c.b16 %v1406, %v1404
        %v1525 = vpack.c.b16 %v1409, %v1407
        %v1526 = vpack.c.b16 %v1410, %v1408
        %v1527 = vpack.c.b16 %v1413, %v1411
        %v1528 = vpack.c.b16 %v1414, %v1412
        %v1529 = vpack.c.b16 %v1417, %v1415
        %v1530 = vpack.c.b16 %v1418, %v1416
        %v1531 = vpack.c.b16 %v1421, %v1419
        %v1532 = vpack.c.b16 %v1422, %v1420
        %v1533 = vpack.c.b16 %v1425, %v1423
        %v1534 = vpack.c.b16 %v1426, %v1424
        %v1535 = vpack.c.b16 %v1429, %v1427
        %v1536 = vpack.c.b16 %v1430, %v1428
        %v1537 = vpack.c.b16 %v1433, %v1431
        %v1538 = vpack.c.b16 %v1434, %v1432
        %v1539 = vpack.c.b16 %v1437, %v1435
        %v1540 = vpack.c.b16 %v1438, %v1436
        %v1541 = vpack.c.b16 %v1441, %v1439
        %v1542 = vpack.c.b16 %v1442, %v1440
        %v1543 = vpack.c.b16 %v1445, %v1443
        %v1544 = vpack.c.b16 %v1446, %v1444
        %v1545 = vpack.c.b16 %v1449, %v1447
        %v1546 = vpack.c.b16 %v1450, %v1448
        %1643 = vmatprep.subr.bf16.mxu0 %v1452
        %1644 = vmatpush1.bf16.msra.mxu0 %v1451
        %1645 = vmatprep.subr.bf16.mxu0 %v1454
        %1646 = vmatpush1.bf16.msra.mxu0 %v1453
        %1647 = vmatprep.subr.bf16.mxu0 %v1456
        %1648 = vmatpush1.bf16.msra.mxu0 %v1455
        %1649 = vmatprep.subr.bf16.mxu0 %v1458
        %1650 = vmatpush1.bf16.msra.mxu0 %v1457
        %1651 = vmatprep.subr.bf16.mxu0 %v1460
        %1652 = vmatpush1.bf16.msra.mxu0 %v1459
        %1653 = vmatprep.subr.bf16.mxu0 %v1462
        %1654 = vmatpush1.bf16.msra.mxu0 %v1461
        %1655 = vmatprep.subr.bf16.mxu0 %v1464
        %1656 = vmatpush1.bf16.msra.mxu0 %v1463
        %1657 = vmatprep.subr.bf16.mxu0 %v1466
        %1658 = vmatpush1.bf16.msra.mxu0 %v1465
        %1659 = vmatprep.subr.bf16.mxu0 %v1468
        %1660 = vmatpush1.bf16.msra.mxu0 %v1467
        %1661 = vmatprep.subr.bf16.mxu0 %v1470
        %1662 = vmatpush1.bf16.msra.mxu0 %v1469
        %1663 = vmatprep.subr.bf16.mxu0 %v1472
        %1664 = vmatpush1.bf16.msra.mxu0 %v1471
        %1665 = vmatprep.subr.bf16.mxu0 %v1474
        %1666 = vmatpush1.bf16.msra.mxu0 %v1473
        %1667 = vmatprep.subr.bf16.mxu0 %v1476
        %1668 = vmatpush1.bf16.msra.mxu0 %v1475
        %1669 = vmatprep.subr.bf16.mxu0 %v1478
        %1670 = vmatpush1.bf16.msra.mxu0 %v1477
        %1671 = vmatprep.subr.bf16.mxu0 %v1480
        %1672 = vmatpush1.bf16.msra.mxu0 %v1479
        %1673 = vmatprep.subr.bf16.mxu0 %v1482
        %1674 = vmatpush1.bf16.msra.mxu0 %v1481
        %1675 = vmatprep.mubr.bf16.mxu0 %v1044
        %1676 = vmatmul.mubr.bf16.gmra.mrb[0].mxu0 %v1043
        %v1677 = vpop.f32.mrb[0].mxu0
        %v1678 = vadd.f32 %v1156, %v1677
        %v1679 = vpop.f32.mrb[0].mxu0
        %v1680 = vadd.f32 %v1160, %v1679
        %v1681 = vpop.f32.mrb[0].mxu0
        %v1682 = vadd.f32 %v1156, %v1681
        %v1683 = vpop.f32.mrb[0].mxu0
        %v1684 = vadd.f32 %v1160, %v1683
        %1685 = vmatprep.mubr.bf16.mxu0 %v1050
        %1686 = vmatmul.mubr.bf16.gmra.mrb[0].mxu0 %v1049
        %v1687 = vpop.f32.mrb[0].mxu0
        %v1688 = vadd.f32 %v1156, %v1687
        %v1689 = vpop.f32.mrb[0].mxu0
        %v1690 = vadd.f32 %v1160, %v1689
        %v1691 = vpop.f32.mrb[0].mxu0
        %v1692 = vadd.f32 %v1156, %v1691
        %v1693 = vpop.f32.mrb[0].mxu0
        %v1694 = vadd.f32 %v1160, %v1693
        %1695 = vdwg.mxu0
        %1696 = vmatprep.subr.bf16.mxu0 %v1484
        %1697 = vmatpush1.bf16.msra.mxu0 %v1483
        %1698 = vmatprep.subr.bf16.mxu0 %v1486
        %1699 = vmatpush1.bf16.msra.mxu0 %v1485
        %1700 = vmatprep.subr.bf16.mxu0 %v1488
        %1701 = vmatpush1.bf16.msra.mxu0 %v1487
        %1702 = vmatprep.subr.bf16.mxu0 %v1490
        %1703 = vmatpush1.bf16.msra.mxu0 %v1489
        %1704 = vmatprep.subr.bf16.mxu0 %v1492
        %1705 = vmatpush1.bf16.msra.mxu0 %v1491
        %1706 = vmatprep.subr.bf16.mxu0 %v1494
        %1707 = vmatpush1.bf16.msra.mxu0 %v1493
        %1708 = vmatprep.subr.bf16.mxu0 %v1496
        %1709 = vmatpush1.bf16.msra.mxu0 %v1495
        %1710 = vmatprep.subr.bf16.mxu0 %v1498
        %1711 = vmatpush1.bf16.msra.mxu0 %v1497
        %1712 = vmatprep.subr.bf16.mxu0 %v1500
        %1713 = vmatpush1.bf16.msra.mxu0 %v1499
        %1714 = vmatprep.subr.bf16.mxu0 %v1502
        %1715 = vmatpush1.bf16.msra.mxu0 %v1501
        %1716 = vmatprep.subr.bf16.mxu0 %v1504
        %1717 = vmatpush1.bf16.msra.mxu0 %v1503
        %1718 = vmatprep.subr.bf16.mxu0 %v1506
        %1719 = vmatpush1.bf16.msra.mxu0 %v1505
        %1720 = vmatprep.subr.bf16.mxu0 %v1508
        %1721 = vmatpush1.bf16.msra.mxu0 %v1507
        %1722 = vmatprep.subr.bf16.mxu0 %v1510
        %1723 = vmatpush1.bf16.msra.mxu0 %v1509
        %1724 = vmatprep.subr.bf16.mxu0 %v1512
        %1725 = vmatpush1.bf16.msra.mxu0 %v1511
        %1726 = vmatprep.subr.bf16.mxu0 %v1514
        %1727 = vmatpush1.bf16.msra.mxu0 %v1513
        %1728 = vmatprep.mubr.bf16.mxu0 %v1046
        %1729 = vmatmul.mubr.bf16.gmra.mrb[0].mxu0 %v1045
        %v1730 = vpop.f32.mrb[0].mxu0
        %v1731 = vadd.f32 %v1678, %v1730
        %v1732 = vpop.f32.mrb[0].mxu0
        %v1733 = vadd.f32 %v1680, %v1732
        %v1734 = vpop.f32.mrb[0].mxu0
        %v1735 = vadd.f32 %v1682, %v1734
        %v1736 = vpop.f32.mrb[0].mxu0
        %v1737 = vadd.f32 %v1684, %v1736
        %1738 = vmatprep.mubr.bf16.mxu0 %v1052
        %1739 = vmatmul.mubr.bf16.gmra.mrb[0].mxu0 %v1051
        %v1740 = vpop.f32.mrb[0].mxu0
        %v1741 = vadd.f32 %v1688, %v1740
        %v1742 = vpop.f32.mrb[0].mxu0
        %v1743 = vadd.f32 %v1690, %v1742
        %v1744 = vpop.f32.mrb[0].mxu0
        %v1745 = vadd.f32 %v1692, %v1744
        %v1746 = vpop.f32.mrb[0].mxu0
        %v1747 = vadd.f32 %v1694, %v1746
        %1748 = vdwg.mxu0
        %1749 = vmatprep.subr.bf16.mxu0 %v1516
        %1750 = vmatpush1.bf16.msra.mxu0 %v1515
        %1751 = vmatprep.subr.bf16.mxu0 %v1518
        %1752 = vmatpush1.bf16.msra.mxu0 %v1517
        %1753 = vmatprep.subr.bf16.mxu0 %v1520
        %1754 = vmatpush1.bf16.msra.mxu0 %v1519
        %1755 = vmatprep.subr.bf16.mxu0 %v1522
        %1756 = vmatpush1.bf16.msra.mxu0 %v1521
        %1757 = vmatprep.subr.bf16.mxu0 %v1524
        %1758 = vmatpush1.bf16.msra.mxu0 %v1523
        %1759 = vmatprep.subr.bf16.mxu0 %v1526
        %1760 = vmatpush1.bf16.msra.mxu0 %v1525
        %1761 = vmatprep.subr.bf16.mxu0 %v1528
        %1762 = vmatpush1.bf16.msra.mxu0 %v1527
        %1763 = vmatprep.subr.bf16.mxu0 %v1530
        %1764 = vmatpush1.bf16.msra.mxu0 %v1529
        %1765 = vmatprep.subr.bf16.mxu0 %v1532
        %1766 = vmatpush1.bf16.msra.mxu0 %v1531
        %1767 = vmatprep.subr.bf16.mxu0 %v1534
        %1768 = vmatpush1.bf16.msra.mxu0 %v1533
        %1769 = vmatprep.subr.bf16.mxu0 %v1536
        %1770 = vmatpush1.bf16.msra.mxu0 %v1535
        %1771 = vmatprep.subr.bf16.mxu0 %v1538
        %1772 = vmatpush1.bf16.msra.mxu0 %v1537
        %1773 = vmatprep.subr.bf16.mxu0 %v1540
        %1774 = vmatpush1.bf16.msra.mxu0 %v1539
        %1775 = vmatprep.subr.bf16.mxu0 %v1542
        %1776 = vmatpush1.bf16.msra.mxu0 %v1541
        %1777 = vmatprep.subr.bf16.mxu0 %v1544
        %1778 = vmatpush1.bf16.msra.mxu0 %v1543
        %1779 = vmatprep.subr.bf16.mxu0 %v1546
        %1780 = vmatpush1.bf16.msra.mxu0 %v1545
        %1781 = vmatprep.mubr.bf16.mxu0 %v1048
        %1782 = vmatmul.mubr.bf16.gmra.mrb[0].mxu0 %v1047
        %v1783 = vpop.f32.mrb[0].mxu0
        %v1784 = vadd.f32 %v1731, %v1783
        %v1785 = vpop.f32.mrb[0].mxu0
        %v1786 = vadd.f32 %v1733, %v1785
        %v1787 = vpop.f32.mrb[0].mxu0
        %v1788 = vadd.f32 %v1735, %v1787
        %v1789 = vpop.f32.mrb[0].mxu0
        %v1790 = vadd.f32 %v1737, %v1789
        %1791 = vmatprep.mubr.bf16.mxu0 %v1054
        %1792 = vmatmul.mubr.bf16.gmra.mrb[0].mxu0 %v1053
        %v1793 = vpop.f32.mrb[0].mxu0
        %v1794 = vadd.f32 %v1741, %v1793
        %v1795 = vpop.f32.mrb[0].mxu0
        %v1796 = vadd.f32 %v1743, %v1795
        %v1797 = vpop.f32.mrb[0].mxu0
        %v1798 = vadd.f32 %v1745, %v1797
        %v1799 = vpop.f32.mrb[0].mxu0
        %v1800 = vadd.f32 %v1747, %v1799
        %1801 = vdwg.mxu0
        %1802 = vst [vmem:[%s315] sm:$0xff] %v1784
        %1803 = vst [vmem:[%s315 + $0x8] sm:$0xff] %v1786
        %1804 = vst [vmem:[%s315 + $0x10] sm:$0xff] %v1788
        %1805 = vst [vmem:[%s315 + $0x18] sm:$0xff] %v1790
        %1806 = vst [vmem:[%s315 + $0x20] sm:$0xff] %v1794
        %1807 = vst [vmem:[%s315 + $0x28] sm:$0xff] %v1796
        %1808 = vst [vmem:[%s315 + $0x30] sm:$0xff] %v1798
        %1809 = vst [vmem:[%s315 + $0x38] sm:$0xff] %v1800
        %s1810 = sand.u32 %s183, 1
        %s1811 = scalar_lea.sflag [#allocation4], %s1810
        %s1812 = sand.u32 %s183, 1
        %s1813 = smul.addr %s1812, 64
        %s1814 = scalar_lea.vmem [#allocation8], %s1813
        // Predicated region
        $region61: #{tpu_custom_call.1} parent=47 // pred_check
          %p1815 = pneg %p193
        $region62: #{tpu_custom_call.1} parent=47 // pred_check_branch
          %1817 = sbr.rel (%p1815) target = $region64
        $region63: #{tpu_custom_call.1} parent=47 // pred_region
          %s1819 = ssub.s32 1024, 1024
          %1820 = vsyncadd %s1811, %s1819
          %s1821 = smul.addr %s23, 8
          %s1822 = smul.addr %s1821, 128
          %s1823 = scalar_lea.hbm %s7, %s1822
          %s1824 = sshll.u32 %s1814, 4
          %s1825 = int_to_ptr.vmem [resolvable:$true] %s1824
          %1830 = dma.vmem_to_hbm [thread:$0]  %s1825, 1024, %s1823, %s1811, 256, 256, 16
        $region64: #{tpu_custom_call.1} parent=47 // pred_fallthru
          _
      $region48: #{tpu_custom_call.1} parent=5 // pred_fallthru
        _
      %p1831 = scmp.le.s32.totalorder 2, %s18
      // Predicated region
      $region65: #{tpu_custom_call.1} parent=5 // pred_check
        %p1832 = pneg %p1831
      $region66: #{tpu_custom_call.1} parent=5 // pred_check_branch
        %1834 = sbr.rel (%p1832) target = $region68
      $region67: #{tpu_custom_call.1} parent=5 // pred_region
        %s1835 = ssub.s32 %s18, 2
        // Predicated region
        $region69: #{tpu_custom_call.1} parent=67 // pred_check
          %p1836 = pneg %p199
        $region70: #{tpu_custom_call.1} parent=67 // pred_check_branch
          %1838 = sbr.rel (%p1836) target = $region72
        $region71: #{tpu_custom_call.1} parent=67 // pred_region
          %s1839 = sand.u32 %s184, 1
          %s1840 = scalar_lea.sflag [#allocation4], %s1839
          %s1841 = sand.u32 %s184, 1
          %s1842 = smul.addr %s1841, 64
          %s1843 = scalar_lea.vmem [#allocation8], %s1842
          %1844 = dma.done %s1840, 1024
        $region72: #{tpu_custom_call.1} parent=67 // pred_fallthru
          _
      $region68: #{tpu_custom_call.1} parent=5 // pred_fallthru
        _
    $region6: #{tpu_custom_call.1} parent=1 // loop_footer
      %s22 = sadd.s32 1, %s18
    $region7: #{tpu_custom_call.1} parent=1 // loop_footer_branch
      %17 = sbr.rel target = $region3
    $region8: #{tpu_custom_call.1} parent=1 // loop_exit
      _
    %1845 = vsyncpa [#allocation3], 1
    %s1846 = scalar_lea.sflag [#allocation3], 1
    %1847 = vsyncpa %s1846, 1
    %1848 = vsyncpa [#allocation6], 1
    %1849 = vsyncpa [#allocation4], 1
    %s1850 = scalar_lea.sflag [#allocation4], 1
    %1851 = vsyncpa %s1850, 1

</llo_original>
